<compile_context>
chip_gen: v6e
topology: v6e:2x2x1
jax: 0.10.0
libtpu: 0.0.40
codegen_flags: <defaults>
</compile_context>

<pallas_src>
import functools

import jax
import jax.numpy as jnp
from jax.experimental import pallas as pl
from jax.experimental.pallas import tpu as pltpu

BN_EPS = 1e-5


def _conv3_reflect(v, w_ref, *, mxu_dtype):
  """3-tap reflect-padded conv of one (C, L) f32 block; returns f32 (C, L).

  w_ref holds the taps stacked as (3, C_out, C_in) with w_ref[k] == w[:, :, k].
  The input is lane-rolled (XLU slot) to align the l-1 / l+1 taps, the reflect
  boundary columns are fixed with a (1, L) lane mask, and the three taps are
  accumulated with three (C, C) @ (C, L) MXU dots (f32 accumulation).
  """
  _, L = v.shape
  lane = jax.lax.broadcasted_iota(jnp.int32, (1, L), 1)
  r_prev = pltpu.roll(v, 1, 1)        # r_prev[:, l] = v[:, l-1]  (wraps at 0)
  r_next = pltpu.roll(v, L - 1, 1)    # r_next[:, l] = v[:, l+1]  (wraps at L-1)
  v_left = jnp.where(lane == 0, r_next, r_prev)       # reflect: v[-1] := v[1]
  v_right = jnp.where(lane == L - 1, r_prev, r_next)  # reflect: v[L]  := v[L-2]
  acc = jnp.dot(w_ref[1], v.astype(mxu_dtype),
                preferred_element_type=jnp.float32)
  acc += jnp.dot(w_ref[0], v_left.astype(mxu_dtype),
                 preferred_element_type=jnp.float32)
  acc += jnp.dot(w_ref[2], v_right.astype(mxu_dtype),
                 preferred_element_type=jnp.float32)
  return acc


def _conv_stats_kernel(x_ref, w_ref, scale_ref, shift_ref,
                       y_ref, sum_ref, sq_ref, *, mxu_dtype, fuse_bn_relu):
  """Per-batch-element block: [BN-affine + ReLU] -> conv3 -> BN statistics."""
  v = x_ref[...].astype(jnp.float32)                       # (C, L)
  if fuse_bn_relu:
    # Previous stage's BatchNorm (scale/shift precomputed from the accumulated
    # batch statistics) fused with ReLU.
    v = jnp.maximum(v * scale_ref[...] + shift_ref[...], 0.0)

  y = _conv3_reflect(v, w_ref, mxu_dtype=mxu_dtype)        # (C, L) f32
  y_ref[...] = y.astype(y_ref.dtype)

  # Per-channel sum / sum-of-squares accumulated across the batch grid axis
  # into grid-resident outputs -> exact BatchNorm statistics over (N, L).
  @pl.when(pl.program_id(0) == 0)
  def _():
    sum_ref[...] = jnp.zeros_like(sum_ref)
    sq_ref[...] = jnp.zeros_like(sq_ref)

  sum_ref[...] += jnp.sum(y, axis=1, keepdims=True)        # (C, 1)
  sq_ref[...] += jnp.sum(y * y, axis=1, keepdims=True)     # (C, 1)


def _bn_residual_kernel(x_ref, y_ref, scale_ref, shift_ref, o_ref):
  """out = x + BN2(conv2_out), applied per batch element."""
  x = x_ref[...].astype(jnp.float32)
  y = y_ref[...].astype(jnp.float32)
  o_ref[...] = (x + y * scale_ref[...] + shift_ref[...]).astype(o_ref.dtype)


def _conv_bn_stats_call(v, w, scale, shift, *, fuse_bn_relu, mxu_dtype):
  N, C, L = v.shape
  blk = pl.BlockSpec((None, C, L), lambda n: (n, 0, 0))
  wsp = pl.BlockSpec((3, C, C), lambda n: (0, 0, 0))
  vsp = pl.BlockSpec((C, 1), lambda n: (0, 0))
  kernel = functools.partial(_conv_stats_kernel, mxu_dtype=mxu_dtype,
                             fuse_bn_relu=fuse_bn_relu)
  return pl.pallas_call(
      kernel,
      grid=(N,),
      in_specs=[blk, wsp, vsp, vsp],
      out_specs=[blk, vsp, vsp],
      out_shape=[
          jax.ShapeDtypeStruct((N, C, L), jnp.float32),    # conv output
          jax.ShapeDtypeStruct((C, 1), jnp.float32),       # per-channel sum
          jax.ShapeDtypeStruct((C, 1), jnp.float32),       # per-channel sum sq
      ],
      compiler_params=pltpu.CompilerParams(
          dimension_semantics=("arbitrary",)),             # stats accumulator
  )(v, w, scale, shift)


def _bn_scale_shift(s, q, gamma, beta, count):
  # O(C) glue between passes (plain XLA).  One-pass variance is fine for
  # normalized-scale activations; use a two-pass variant for huge-mean inputs.
  mean = s / count
  var = q / count - mean * mean                            # biased variance
  scale = gamma * jax.lax.rsqrt(var + BN_EPS)
  shift = beta - mean * scale
  return scale, shift


def resnet_block(x, w1, g1, b1, w2, g2, b2, *, mxu_dtype=jnp.bfloat16):
  """x: (N, C, L); w*: (C, C, 3) Conv1d weights; g*/b*: (C,) BN affine."""
  N, C, L = x.shape
  count = jnp.float32(N * L)

  # Tap-major weight stacking (ws[k] == w[:, :, k]); MXU operands cast once,
  # in the wrapper, to the requested (default bf16) dtype.
  ws1 = jnp.transpose(w1, (2, 0, 1)).astype(mxu_dtype)     # (3, C, C)
  ws2 = jnp.transpose(w2, (2, 0, 1)).astype(mxu_dtype)
  g1 = jnp.reshape(g1, (C, 1)).astype(jnp.float32)
  b1 = jnp.reshape(b1, (C, 1)).astype(jnp.float32)
  g2 = jnp.reshape(g2, (C, 1)).astype(jnp.float32)
  b2 = jnp.reshape(b2, (C, 1)).astype(jnp.float32)
  one = jnp.ones((C, 1), jnp.float32)      # dummy scale/shift for pass 1
  zero = jnp.zeros((C, 1), jnp.float32)    # (ignored when fuse_bn_relu=False)

  # Pass 1: conv1 + BN1 statistics.
  y1, s1, q1 = _conv_bn_stats_call(x, ws1, one, zero,
                                   fuse_bn_relu=False, mxu_dtype=mxu_dtype)
  scale1, shift1 = _bn_scale_shift(s1, q1, g1, b1, count)

  # Pass 2: BN1-apply + ReLU + conv2 + BN2 statistics.
  y2, s2, q2 = _conv_bn_stats_call(y1, ws2, scale1, shift1,
                                   fuse_bn_relu=True, mxu_dtype=mxu_dtype)
  scale2, shift2 = _bn_scale_shift(s2, q2, g2, b2, count)

  # Pass 3: BN2-apply + residual (independent per batch element -> "parallel").
  blk = pl.BlockSpec((None, C, L), lambda n: (n, 0, 0))
  vsp = pl.BlockSpec((C, 1), lambda n: (0, 0))
  return pl.pallas_call(
      _bn_residual_kernel,
      grid=(N,),
      in_specs=[blk, blk, vsp, vsp],
      out_specs=blk,
      out_shape=jax.ShapeDtypeStruct((N, C, L), x.dtype),
      compiler_params=pltpu.CompilerParams(
          dimension_semantics=("parallel",)),
  )(x, y2, scale2, shift2)


def resnet_block_ref(x, w1, g1, b1, w2, g2, b2):
  """Pure-JAX f32 reference of the same forward pass (for sanity checking)."""
  def pad(v):
    return jnp.concatenate([v[:, :, 1:2], v, v[:, :, -2:-1]], axis=-1)

  def conv(v_pad, w):
    L = v_pad.shape[-1] - 2
    return sum(jnp.einsum('oi,nil->nol', w[:, :, k], v_pad[:, :, k:k + L])
               for k in range(3))

  def bn(v, g, b):
    m = jnp.mean(v, axis=(0, 2), keepdims=True)
    var = jnp.mean((v - m) ** 2, axis=(0, 2), keepdims=True)
    g = jnp.reshape(g, (1, -1, 1))
    b = jnp.reshape(b, (1, -1, 1))
    return (v - m) / jnp.sqrt(var + BN_EPS) * g + b

  y = bn(conv(pad(x), w1), g1, b1)
  y = jnp.maximum(y, 0.0)
  y = bn(conv(pad(y), w2), g2, b2)
  return x + y


if __name__ == "__main__":
  key = jax.random.PRNGKey(0)
  # batch, channels (dim), sequence length
  N, C, L = 2, 8, 64
  k_x, k_w1, k_w2 = jax.random.split(key, 3)

  x = jax.random.normal(k_x, (N, C, L), dtype=jnp.float32)
  # Conv1d weights: (out_channels, in_channels, kernel_size=3), no bias.
  w1 = 0.02 * jax.random.normal(k_w1, (C, C, 3), dtype=jnp.float32)
  w2 = 0.02 * jax.random.normal(k_w2, (C, C, 3), dtype=jnp.float32)
  # BatchNorm1d affine params, default PyTorch init (gamma=1, beta=0).
  g1 = jnp.ones((C,), jnp.float32)
  b1 = jnp.zeros((C,), jnp.float32)
  g2 = jnp.ones((C,), jnp.float32)
  b2 = jnp.zeros((C,), jnp.float32)

  ref = resnet_block_ref(x, w1, g1, b1, w2, g2, b2)
  fwd = jax.jit(resnet_block, static_argnames=("mxu_dtype",))

  # f32 MXU path: tight check (structural + numerical correctness).
  out_f32 = jax.block_until_ready(
      fwd(x, w1, g1, b1, w2, g2, b2, mxu_dtype=jnp.float32))
  assert out_f32.shape == (N, C, L)
  assert jnp.allclose(out_f32, ref, rtol=1e-4, atol=1e-4), "f32 path mismatch"

  # Default fast path: bf16 MXU operands with f32 accumulation.  Relaxed
  # tolerance only accounts for bf16 operand rounding; the structure is
  # already verified exactly by the f32 check above.
  out_bf16 = jax.block_until_ready(
      fwd(x, w1, g1, b1, w2, g2, b2, mxu_dtype=jnp.bfloat16))
  assert out_bf16.shape == (N, C, L)
  assert jnp.allclose(out_bf16, ref, rtol=1e-1, atol=1e-1), "bf16 path mismatch"

  print("KERNEL_OK")
</pallas_src>

<mosaic_0001>
module attributes {stable_mosaic.version = 11 : i64} {
  func.func @_conv_stats_kernel(%arg0: i32, %arg1: memref<1x8x64xf32, #tpu.memory_space<vmem>>, %arg2: memref<3x8x8xf32, #tpu.memory_space<vmem>>, %arg3: memref<8x1xf32, #tpu.memory_space<vmem>>, %arg4: memref<8x1xf32, #tpu.memory_space<vmem>>, %arg5: memref<1x8x64xf32, #tpu.memory_space<vmem>>, %arg6: memref<8x1xf32, #tpu.memory_space<vmem>>, %arg7: memref<8x1xf32, #tpu.memory_space<vmem>>) attributes {dimension_semantics = [#tpu.dimension_semantics<arbitrary>], iteration_bounds = array<i64: 2>, scalar_prefetch = 0 : i64, scratch_operands = 0 : i64, tpu.core_type = #tpu.core_type<tc>, window_params = [{transform_indices = @transform_0, window_bounds = array<i64: 1, 8, 64>}, {pipeline_mode = #tpu.pipeline_mode<synchronous>, transform_indices = @transform_1, window_bounds = array<i64: 3, 8, 8>}, {pipeline_mode = #tpu.pipeline_mode<synchronous>, transform_indices = @transform_2, window_bounds = array<i64: 8, 1>}, {pipeline_mode = #tpu.pipeline_mode<synchronous>, transform_indices = @transform_3, window_bounds = array<i64: 8, 1>}, {transform_indices = @transform_4, window_bounds = array<i64: 1, 8, 64>}, {pipeline_mode = #tpu.pipeline_mode<synchronous>, transform_indices = @transform_5, window_bounds = array<i64: 8, 1>}, {pipeline_mode = #tpu.pipeline_mode<synchronous>, transform_indices = @transform_6, window_bounds = array<i64: 8, 1>}]} {
    %c0 = arith.constant 0 : index
    %c0_0 = arith.constant 0 : index
    %c0_1 = arith.constant 0 : index
    %0 = vector.load %arg1[%c0, %c0_0, %c0_1] : memref<1x8x64xf32, #tpu.memory_space<vmem>>, vector<1x8x64xf32>
    %1 = vector.shape_cast %0 : vector<1x8x64xf32> to vector<8x64xf32>
    %c0_2 = arith.constant 0 : index
    %c0_3 = arith.constant 0 : index
    %2 = vector.load %arg3[%c0_2, %c0_3] : memref<8x1xf32, #tpu.memory_space<vmem>>, vector<8x1xf32>
    %3 = vector.broadcast %2 : vector<8x1xf32> to vector<8x64xf32>
    %4 = arith.mulf %1, %3 : vector<8x64xf32>
    %c0_4 = arith.constant 0 : index
    %c0_5 = arith.constant 0 : index
    %5 = vector.load %arg4[%c0_4, %c0_5] : memref<8x1xf32, #tpu.memory_space<vmem>>, vector<8x1xf32>
    %6 = vector.broadcast %5 : vector<8x1xf32> to vector<8x64xf32>
    %7 = arith.addf %4, %6 : vector<8x64xf32>
    %cst = arith.constant 0.000000e+00 : f32
    %8 = vector.broadcast %cst : f32 to vector<8x64xf32>
    %9 = arith.maximumf %7, %8 : vector<8x64xf32>
    %10 = tpu.iota {dimensions = array<i32: 1>} : vector<1x64xi32>
    %c1_i32 = arith.constant 1 : i32
    %11 = tpu.dynamic_rotate %9 by %c1_i32 dim 1 : vector<8x64xf32>, i32 -> vector<8x64xf32>
    %c63_i32 = arith.constant 63 : i32
    %12 = tpu.dynamic_rotate %9 by %c63_i32 dim 1 : vector<8x64xf32>, i32 -> vector<8x64xf32>
    %c0_i32 = arith.constant 0 : i32
    %13 = vector.broadcast %c0_i32 : i32 to vector<1x64xi32>
    %14 = arith.cmpi eq, %10, %13 : vector<1x64xi32>
    %15 = vector.shape_cast %14 : vector<1x64xi1> to vector<1x64xi1>
    %16 = vector.broadcast %15 : vector<1x64xi1> to vector<8x64xi1>
    %17 = arith.select %16, %12, %11 : vector<8x64xi1>, vector<8x64xf32>
    %c63_i32_6 = arith.constant 63 : i32
    %18 = vector.broadcast %c63_i32_6 : i32 to vector<1x64xi32>
    %19 = arith.cmpi eq, %10, %18 : vector<1x64xi32>
    %20 = vector.shape_cast %19 : vector<1x64xi1> to vector<1x64xi1>
    %21 = vector.broadcast %20 : vector<1x64xi1> to vector<8x64xi1>
    %22 = arith.select %21, %11, %12 : vector<8x64xi1>, vector<8x64xf32>
    %c1 = arith.constant 1 : index
    %c0_7 = arith.constant 0 : index
    %c0_8 = arith.constant 0 : index
    %23 = vector.load %arg2[%c1, %c0_7, %c0_8] : memref<3x8x8xf32, #tpu.memory_space<vmem>>, vector<1x8x8xf32>
    %24 = vector.shape_cast %23 : vector<1x8x8xf32> to vector<8x8xf32>
    %cst_9 = arith.constant dense<0.000000e+00> : vector<8x64xf32>
    %25 = tpu.matmul %24, %9, %cst_9 {dimension_numbers = #tpu.dot_dimension_numbers<[1], [0], [0], [1], [0, 0, 1, 1], [], []>} : vector<8x8xf32>, vector<8x64xf32>, vector<8x64xf32> -> vector<8x64xf32>
    %c0_10 = arith.constant 0 : index
    %c0_11 = arith.constant 0 : index
    %c0_12 = arith.constant 0 : index
    %26 = vector.load %arg2[%c0_10, %c0_11, %c0_12] : memref<3x8x8xf32, #tpu.memory_space<vmem>>, vector<1x8x8xf32>
    %27 = vector.shape_cast %26 : vector<1x8x8xf32> to vector<8x8xf32>
    %cst_13 = arith.constant dense<0.000000e+00> : vector<8x64xf32>
    %28 = tpu.matmul %27, %17, %cst_13 {dimension_numbers = #tpu.dot_dimension_numbers<[1], [0], [0], [1], [0, 0, 1, 1], [], []>} : vector<8x8xf32>, vector<8x64xf32>, vector<8x64xf32> -> vector<8x64xf32>
    %29 = arith.addf %25, %28 : vector<8x64xf32>
    %c2 = arith.constant 2 : index
    %c0_14 = arith.constant 0 : index
    %c0_15 = arith.constant 0 : index
    %30 = vector.load %arg2[%c2, %c0_14, %c0_15] : memref<3x8x8xf32, #tpu.memory_space<vmem>>, vector<1x8x8xf32>
    %31 = vector.shape_cast %30 : vector<1x8x8xf32> to vector<8x8xf32>
    %cst_16 = arith.constant dense<0.000000e+00> : vector<8x64xf32>
    %32 = tpu.matmul %31, %22, %cst_16 {dimension_numbers = #tpu.dot_dimension_numbers<[1], [0], [0], [1], [0, 0, 1, 1], [], []>} : vector<8x8xf32>, vector<8x64xf32>, vector<8x64xf32> -> vector<8x64xf32>
    %33 = arith.addf %29, %32 : vector<8x64xf32>
    %c0_17 = arith.constant 0 : index
    %c0_18 = arith.constant 0 : index
    %c0_19 = arith.constant 0 : index
    %34 = vector.load %arg5[%c0_17, %c0_18, %c0_19] : memref<1x8x64xf32, #tpu.memory_space<vmem>>, vector<1x8x64xf32>
    %35 = vector.shape_cast %34 : vector<1x8x64xf32> to vector<8x64xf32>
    %36 = vector.shape_cast %33 : vector<8x64xf32> to vector<1x8x64xf32>
    tpu.vector_store %arg5[%c0_17, %c0_18, %c0_19], %36 {strides = array<i32>} : memref<1x8x64xf32, #tpu.memory_space<vmem>>, vector<1x8x64xf32>,
    %c0_i32_20 = arith.constant 0 : i32
    %37 = arith.cmpi eq, %arg0, %c0_i32_20 : i32
    %38 = arith.extui %37 : i1 to i32
    %c0_i32_21 = arith.constant 0 : i32
    %39 = arith.cmpi ne, %38, %c0_i32_21 : i32
    scf.if %39 {
      %cst_32 = arith.constant 0.000000e+00 : f32
      %51 = vector.broadcast %cst_32 : f32 to vector<8x1xf32>
      %c0_33 = arith.constant 0 : index
      %c0_34 = arith.constant 0 : index
      %52 = vector.load %arg6[%c0_33, %c0_34] : memref<8x1xf32, #tpu.memory_space<vmem>>, vector<8x1xf32>
      tpu.vector_store %arg6[%c0_33, %c0_34], %51 {strides = array<i32>} : memref<8x1xf32, #tpu.memory_space<vmem>>, vector<8x1xf32>,
      %cst_35 = arith.constant 0.000000e+00 : f32
      %53 = vector.broadcast %cst_35 : f32 to vector<8x1xf32>
      %c0_36 = arith.constant 0 : index
      %c0_37 = arith.constant 0 : index
      %54 = vector.load %arg7[%c0_36, %c0_37] : memref<8x1xf32, #tpu.memory_space<vmem>>, vector<8x1xf32>
      tpu.vector_store %arg7[%c0_36, %c0_37], %53 {strides = array<i32>} : memref<8x1xf32, #tpu.memory_space<vmem>>, vector<8x1xf32>,
    } else {
    }
    %c0_22 = arith.constant 0 : index
    %c0_23 = arith.constant 0 : index
    %40 = vector.load %arg6[%c0_22, %c0_23] : memref<8x1xf32, #tpu.memory_space<vmem>>, vector<8x1xf32>
    %cst_24 = arith.constant dense<0.000000e+00> : vector<8xf32>
    %41 = vector.multi_reduction <add>, %33, %cst_24 [1] : vector<8x64xf32> to vector<8xf32>
    %42 = vector.shape_cast %41 : vector<8xf32> to vector<8x1xf32>
    %43 = arith.addf %40, %42 : vector<8x1xf32>
    %c0_25 = arith.constant 0 : index
    %c0_26 = arith.constant 0 : index
    %44 = vector.load %arg6[%c0_25, %c0_26] : memref<8x1xf32, #tpu.memory_space<vmem>>, vector<8x1xf32>
    tpu.vector_store %arg6[%c0_25, %c0_26], %43 {strides = array<i32>} : memref<8x1xf32, #tpu.memory_space<vmem>>, vector<8x1xf32>,
    %c0_27 = arith.constant 0 : index
    %c0_28 = arith.constant 0 : index
    %45 = vector.load %arg7[%c0_27, %c0_28] : memref<8x1xf32, #tpu.memory_space<vmem>>, vector<8x1xf32>
    %46 = arith.mulf %33, %33 : vector<8x64xf32>
    %cst_29 = arith.constant dense<0.000000e+00> : vector<8xf32>
    %47 = vector.multi_reduction <add>, %46, %cst_29 [1] : vector<8x64xf32> to vector<8xf32>
    %48 = vector.shape_cast %47 : vector<8xf32> to vector<8x1xf32>
    %49 = arith.addf %45, %48 : vector<8x1xf32>
    %c0_30 = arith.constant 0 : index
    %c0_31 = arith.constant 0 : index
    %50 = vector.load %arg7[%c0_30, %c0_31] : memref<8x1xf32, #tpu.memory_space<vmem>>, vector<8x1xf32>
    tpu.vector_store %arg7[%c0_30, %c0_31], %49 {strides = array<i32>} : memref<8x1xf32, #tpu.memory_space<vmem>>, vector<8x1xf32>,
    return
  }
  func.func @transform_0(%arg0: i32) -> (i32, i32, i32) {
    %c0_i32 = arith.constant 0 : i32
    %c0_i32_0 = arith.constant 0 : i32
    %c0_i32_1 = arith.constant 0 : i32
    return %arg0, %c0_i32, %c0_i32_0 : i32, i32, i32
  }
  func.func @transform_1(%arg0: i32) -> (i32, i32, i32) {
    %c0_i32 = arith.constant 0 : i32
    %c0_i32_0 = arith.constant 0 : i32
    %c0_i32_1 = arith.constant 0 : i32
    %c0_i32_2 = arith.constant 0 : i32
    return %c0_i32, %c0_i32_0, %c0_i32_1 : i32, i32, i32
  }
  func.func @transform_2(%arg0: i32) -> (i32, i32) {
    %c0_i32 = arith.constant 0 : i32
    %c0_i32_0 = arith.constant 0 : i32
    %c0_i32_1 = arith.constant 0 : i32
    return %c0_i32, %c0_i32_0 : i32, i32
  }
  func.func @transform_3(%arg0: i32) -> (i32, i32) {
    %c0_i32 = arith.constant 0 : i32
    %c0_i32_0 = arith.constant 0 : i32
    %c0_i32_1 = arith.constant 0 : i32
    return %c0_i32, %c0_i32_0 : i32, i32
  }
  func.func @transform_4(%arg0: i32) -> (i32, i32, i32) {
    %c0_i32 = arith.constant 0 : i32
    %c0_i32_0 = arith.constant 0 : i32
    %c0_i32_1 = arith.constant 0 : i32
    return %arg0, %c0_i32, %c0_i32_0 : i32, i32, i32
  }
  func.func @transform_5(%arg0: i32) -> (i32, i32) {
    %c0_i32 = arith.constant 0 : i32
    %c0_i32_0 = arith.constant 0 : i32
    %c0_i32_1 = arith.constant 0 : i32
    return %c0_i32, %c0_i32_0 : i32, i32
  }
  func.func @transform_6(%arg0: i32) -> (i32, i32) {
    %c0_i32 = arith.constant 0 : i32
    %c0_i32_0 = arith.constant 0 : i32
    %c0_i32_1 = arith.constant 0 : i32
    return %c0_i32, %c0_i32_0 : i32, i32
  }
}

module attributes {stable_mosaic.version = 11 : i64} {
  func.func @_bn_residual_kernel(%arg0: i32, %arg1: memref<1x8x64xf32, #tpu.memory_space<vmem>>, %arg2: memref<1x8x64xf32, #tpu.memory_space<vmem>>, %arg3: memref<8x1xf32, #tpu.memory_space<vmem>>, %arg4: memref<8x1xf32, #tpu.memory_space<vmem>>, %arg5: memref<1x8x64xf32, #tpu.memory_space<vmem>>) attributes {dimension_semantics = [#tpu.dimension_semantics<parallel>], iteration_bounds = array<i64: 2>, scalar_prefetch = 0 : i64, scratch_operands = 0 : i64, tpu.core_type = #tpu.core_type<tc>, window_params = [{transform_indices = @transform_0, window_bounds = array<i64: 1, 8, 64>}, {transform_indices = @transform_1, window_bounds = array<i64: 1, 8, 64>}, {pipeline_mode = #tpu.pipeline_mode<synchronous>, transform_indices = @transform_2, window_bounds = array<i64: 8, 1>}, {pipeline_mode = #tpu.pipeline_mode<synchronous>, transform_indices = @transform_3, window_bounds = array<i64: 8, 1>}, {transform_indices = @transform_4, window_bounds = array<i64: 1, 8, 64>}]} {
    %c0 = arith.constant 0 : index
    %c0_0 = arith.constant 0 : index
    %c0_1 = arith.constant 0 : index
    %0 = vector.load %arg1[%c0, %c0_0, %c0_1] : memref<1x8x64xf32, #tpu.memory_space<vmem>>, vector<1x8x64xf32>
    %1 = vector.shape_cast %0 : vector<1x8x64xf32> to vector<8x64xf32>
    %c0_2 = arith.constant 0 : index
    %c0_3 = arith.constant 0 : index
    %c0_4 = arith.constant 0 : index
    %2 = vector.load %arg2[%c0_2, %c0_3, %c0_4] : memref<1x8x64xf32, #tpu.memory_space<vmem>>, vector<1x8x64xf32>
    %3 = vector.shape_cast %2 : vector<1x8x64xf32> to vector<8x64xf32>
    %c0_5 = arith.constant 0 : index
    %c0_6 = arith.constant 0 : index
    %4 = vector.load %arg3[%c0_5, %c0_6] : memref<8x1xf32, #tpu.memory_space<vmem>>, vector<8x1xf32>
    %5 = vector.broadcast %4 : vector<8x1xf32> to vector<8x64xf32>
    %6 = arith.mulf %3, %5 : vector<8x64xf32>
    %7 = arith.addf %1, %6 : vector<8x64xf32>
    %c0_7 = arith.constant 0 : index
    %c0_8 = arith.constant 0 : index
    %8 = vector.load %arg4[%c0_7, %c0_8] : memref<8x1xf32, #tpu.memory_space<vmem>>, vector<8x1xf32>
    %9 = vector.broadcast %8 : vector<8x1xf32> to vector<8x64xf32>
    %10 = arith.addf %7, %9 : vector<8x64xf32>
    %c0_9 = arith.constant 0 : index
    %c0_10 = arith.constant 0 : index
    %c0_11 = arith.constant 0 : index
    %11 = vector.load %arg5[%c0_9, %c0_10, %c0_11] : memref<1x8x64xf32, #tpu.memory_space<vmem>>, vector<1x8x64xf32>
    %12 = vector.shape_cast %11 : vector<1x8x64xf32> to vector<8x64xf32>
    %13 = vector.shape_cast %10 : vector<8x64xf32> to vector<1x8x64xf32>
    tpu.vector_store %arg5[%c0_9, %c0_10, %c0_11], %13 {strides = array<i32>} : memref<1x8x64xf32, #tpu.memory_space<vmem>>, vector<1x8x64xf32>,
    return
  }
  func.func @transform_0(%arg0: i32) -> (i32, i32, i32) {
    %c0_i32 = arith.constant 0 : i32
    %c0_i32_0 = arith.constant 0 : i32
    %c0_i32_1 = arith.constant 0 : i32
    return %arg0, %c0_i32, %c0_i32_0 : i32, i32, i32
  }
  func.func @transform_1(%arg0: i32) -> (i32, i32, i32) {
    %c0_i32 = arith.constant 0 : i32
    %c0_i32_0 = arith.constant 0 : i32
    %c0_i32_1 = arith.constant 0 : i32
    return %arg0, %c0_i32, %c0_i32_0 : i32, i32, i32
  }
  func.func @transform_2(%arg0: i32) -> (i32, i32) {
    %c0_i32 = arith.constant 0 : i32
    %c0_i32_0 = arith.constant 0 : i32
    %c0_i32_1 = arith.constant 0 : i32
    return %c0_i32, %c0_i32_0 : i32, i32
  }
  func.func @transform_3(%arg0: i32) -> (i32, i32) {
    %c0_i32 = arith.constant 0 : i32
    %c0_i32_0 = arith.constant 0 : i32
    %c0_i32_1 = arith.constant 0 : i32
    return %c0_i32, %c0_i32_0 : i32, i32
  }
  func.func @transform_4(%arg0: i32) -> (i32, i32, i32) {
    %c0_i32 = arith.constant 0 : i32
    %c0_i32_0 = arith.constant 0 : i32
    %c0_i32_1 = arith.constant 0 : i32
    return %arg0, %c0_i32, %c0_i32_0 : i32, i32, i32
  }
}

module attributes {stable_mosaic.version = 11 : i64} {
  func.func @_conv_stats_kernel(%arg0: i32, %arg1: memref<1x8x64xf32, #tpu.memory_space<vmem>>, %arg2: memref<3x8x8xf32, #tpu.memory_space<vmem>>, %arg3: memref<8x1xf32, #tpu.memory_space<vmem>>, %arg4: memref<8x1xf32, #tpu.memory_space<vmem>>, %arg5: memref<1x8x64xf32, #tpu.memory_space<vmem>>, %arg6: memref<8x1xf32, #tpu.memory_space<vmem>>, %arg7: memref<8x1xf32, #tpu.memory_space<vmem>>) attributes {dimension_semantics = [#tpu.dimension_semantics<arbitrary>], iteration_bounds = array<i64: 2>, scalar_prefetch = 0 : i64, scratch_operands = 0 : i64, tpu.core_type = #tpu.core_type<tc>, window_params = [{transform_indices = @transform_0, window_bounds = array<i64: 1, 8, 64>}, {pipeline_mode = #tpu.pipeline_mode<synchronous>, transform_indices = @transform_1, window_bounds = array<i64: 3, 8, 8>}, {pipeline_mode = #tpu.pipeline_mode<synchronous>, transform_indices = @transform_2, window_bounds = array<i64: 8, 1>}, {pipeline_mode = #tpu.pipeline_mode<synchronous>, transform_indices = @transform_3, window_bounds = array<i64: 8, 1>}, {transform_indices = @transform_4, window_bounds = array<i64: 1, 8, 64>}, {pipeline_mode = #tpu.pipeline_mode<synchronous>, transform_indices = @transform_5, window_bounds = array<i64: 8, 1>}, {pipeline_mode = #tpu.pipeline_mode<synchronous>, transform_indices = @transform_6, window_bounds = array<i64: 8, 1>}]} {
    %c0 = arith.constant 0 : index
    %c0_0 = arith.constant 0 : index
    %c0_1 = arith.constant 0 : index
    %0 = vector.load %arg1[%c0, %c0_0, %c0_1] : memref<1x8x64xf32, #tpu.memory_space<vmem>>, vector<1x8x64xf32>
    %1 = vector.shape_cast %0 : vector<1x8x64xf32> to vector<8x64xf32>
    %2 = tpu.iota {dimensions = array<i32: 1>} : vector<1x64xi32>
    %c1_i32 = arith.constant 1 : i32
    %3 = tpu.dynamic_rotate %1 by %c1_i32 dim 1 : vector<8x64xf32>, i32 -> vector<8x64xf32>
    %c63_i32 = arith.constant 63 : i32
    %4 = tpu.dynamic_rotate %1 by %c63_i32 dim 1 : vector<8x64xf32>, i32 -> vector<8x64xf32>
    %c0_i32 = arith.constant 0 : i32
    %5 = vector.broadcast %c0_i32 : i32 to vector<1x64xi32>
    %6 = arith.cmpi eq, %2, %5 : vector<1x64xi32>
    %7 = vector.shape_cast %6 : vector<1x64xi1> to vector<1x64xi1>
    %8 = vector.broadcast %7 : vector<1x64xi1> to vector<8x64xi1>
    %9 = arith.select %8, %4, %3 : vector<8x64xi1>, vector<8x64xf32>
    %c63_i32_2 = arith.constant 63 : i32
    %10 = vector.broadcast %c63_i32_2 : i32 to vector<1x64xi32>
    %11 = arith.cmpi eq, %2, %10 : vector<1x64xi32>
    %12 = vector.shape_cast %11 : vector<1x64xi1> to vector<1x64xi1>
    %13 = vector.broadcast %12 : vector<1x64xi1> to vector<8x64xi1>
    %14 = arith.select %13, %3, %4 : vector<8x64xi1>, vector<8x64xf32>
    %c1 = arith.constant 1 : index
    %c0_3 = arith.constant 0 : index
    %c0_4 = arith.constant 0 : index
    %15 = vector.load %arg2[%c1, %c0_3, %c0_4] : memref<3x8x8xf32, #tpu.memory_space<vmem>>, vector<1x8x8xf32>
    %16 = vector.shape_cast %15 : vector<1x8x8xf32> to vector<8x8xf32>
    %cst = arith.constant dense<0.000000e+00> : vector<8x64xf32>
    %17 = tpu.matmul %16, %1, %cst {dimension_numbers = #tpu.dot_dimension_numbers<[1], [0], [0], [1], [0, 0, 1, 1], [], []>} : vector<8x8xf32>, vector<8x64xf32>, vector<8x64xf32> -> vector<8x64xf32>
    %c0_5 = arith.constant 0 : index
    %c0_6 = arith.constant 0 : index
    %c0_7 = arith.constant 0 : index
    %18 = vector.load %arg2[%c0_5, %c0_6, %c0_7] : memref<3x8x8xf32, #tpu.memory_space<vmem>>, vector<1x8x8xf32>
    %19 = vector.shape_cast %18 : vector<1x8x8xf32> to vector<8x8xf32>
    %cst_8 = arith.constant dense<0.000000e+00> : vector<8x64xf32>
    %20 = tpu.matmul %19, %9, %cst_8 {dimension_numbers = #tpu.dot_dimension_numbers<[1], [0], [0], [1], [0, 0, 1, 1], [], []>} : vector<8x8xf32>, vector<8x64xf32>, vector<8x64xf32> -> vector<8x64xf32>
    %21 = arith.addf %17, %20 : vector<8x64xf32>
    %c2 = arith.constant 2 : index
    %c0_9 = arith.constant 0 : index
    %c0_10 = arith.constant 0 : index
    %22 = vector.load %arg2[%c2, %c0_9, %c0_10] : memref<3x8x8xf32, #tpu.memory_space<vmem>>, vector<1x8x8xf32>
    %23 = vector.shape_cast %22 : vector<1x8x8xf32> to vector<8x8xf32>
    %cst_11 = arith.constant dense<0.000000e+00> : vector<8x64xf32>
    %24 = tpu.matmul %23, %14, %cst_11 {dimension_numbers = #tpu.dot_dimension_numbers<[1], [0], [0], [1], [0, 0, 1, 1], [], []>} : vector<8x8xf32>, vector<8x64xf32>, vector<8x64xf32> -> vector<8x64xf32>
    %25 = arith.addf %21, %24 : vector<8x64xf32>
    %c0_12 = arith.constant 0 : index
    %c0_13 = arith.constant 0 : index
    %c0_14 = arith.constant 0 : index
    %26 = vector.load %arg5[%c0_12, %c0_13, %c0_14] : memref<1x8x64xf32, #tpu.memory_space<vmem>>, vector<1x8x64xf32>
    %27 = vector.shape_cast %26 : vector<1x8x64xf32> to vector<8x64xf32>
    %28 = vector.shape_cast %25 : vector<8x64xf32> to vector<1x8x64xf32>
    tpu.vector_store %arg5[%c0_12, %c0_13, %c0_14], %28 {strides = array<i32>} : memref<1x8x64xf32, #tpu.memory_space<vmem>>, vector<1x8x64xf32>,
    %c0_i32_15 = arith.constant 0 : i32
    %29 = arith.cmpi eq, %arg0, %c0_i32_15 : i32
    %30 = arith.extui %29 : i1 to i32
    %c0_i32_16 = arith.constant 0 : i32
    %31 = arith.cmpi ne, %30, %c0_i32_16 : i32
    scf.if %31 {
      %cst_27 = arith.constant 0.000000e+00 : f32
      %43 = vector.broadcast %cst_27 : f32 to vector<8x1xf32>
      %c0_28 = arith.constant 0 : index
      %c0_29 = arith.constant 0 : index
      %44 = vector.load %arg6[%c0_28, %c0_29] : memref<8x1xf32, #tpu.memory_space<vmem>>, vector<8x1xf32>
      tpu.vector_store %arg6[%c0_28, %c0_29], %43 {strides = array<i32>} : memref<8x1xf32, #tpu.memory_space<vmem>>, vector<8x1xf32>,
      %cst_30 = arith.constant 0.000000e+00 : f32
      %45 = vector.broadcast %cst_30 : f32 to vector<8x1xf32>
      %c0_31 = arith.constant 0 : index
      %c0_32 = arith.constant 0 : index
      %46 = vector.load %arg7[%c0_31, %c0_32] : memref<8x1xf32, #tpu.memory_space<vmem>>, vector<8x1xf32>
      tpu.vector_store %arg7[%c0_31, %c0_32], %45 {strides = array<i32>} : memref<8x1xf32, #tpu.memory_space<vmem>>, vector<8x1xf32>,
    } else {
    }
    %c0_17 = arith.constant 0 : index
    %c0_18 = arith.constant 0 : index
    %32 = vector.load %arg6[%c0_17, %c0_18] : memref<8x1xf32, #tpu.memory_space<vmem>>, vector<8x1xf32>
    %cst_19 = arith.constant dense<0.000000e+00> : vector<8xf32>
    %33 = vector.multi_reduction <add>, %25, %cst_19 [1] : vector<8x64xf32> to vector<8xf32>
    %34 = vector.shape_cast %33 : vector<8xf32> to vector<8x1xf32>
    %35 = arith.addf %32, %34 : vector<8x1xf32>
    %c0_20 = arith.constant 0 : index
    %c0_21 = arith.constant 0 : index
    %36 = vector.load %arg6[%c0_20, %c0_21] : memref<8x1xf32, #tpu.memory_space<vmem>>, vector<8x1xf32>
    tpu.vector_store %arg6[%c0_20, %c0_21], %35 {strides = array<i32>} : memref<8x1xf32, #tpu.memory_space<vmem>>, vector<8x1xf32>,
    %c0_22 = arith.constant 0 : index
    %c0_23 = arith.constant 0 : index
    %37 = vector.load %arg7[%c0_22, %c0_23] : memref<8x1xf32, #tpu.memory_space<vmem>>, vector<8x1xf32>
    %38 = arith.mulf %25, %25 : vector<8x64xf32>
    %cst_24 = arith.constant dense<0.000000e+00> : vector<8xf32>
    %39 = vector.multi_reduction <add>, %38, %cst_24 [1] : vector<8x64xf32> to vector<8xf32>
    %40 = vector.shape_cast %39 : vector<8xf32> to vector<8x1xf32>
    %41 = arith.addf %37, %40 : vector<8x1xf32>
    %c0_25 = arith.constant 0 : index
    %c0_26 = arith.constant 0 : index
    %42 = vector.load %arg7[%c0_25, %c0_26] : memref<8x1xf32, #tpu.memory_space<vmem>>, vector<8x1xf32>
    tpu.vector_store %arg7[%c0_25, %c0_26], %41 {strides = array<i32>} : memref<8x1xf32, #tpu.memory_space<vmem>>, vector<8x1xf32>,
    return
  }
  func.func @transform_0(%arg0: i32) -> (i32, i32, i32) {
    %c0_i32 = arith.constant 0 : i32
    %c0_i32_0 = arith.constant 0 : i32
    %c0_i32_1 = arith.constant 0 : i32
    return %arg0, %c0_i32, %c0_i32_0 : i32, i32, i32
  }
  func.func @transform_1(%arg0: i32) -> (i32, i32, i32) {
    %c0_i32 = arith.constant 0 : i32
    %c0_i32_0 = arith.constant 0 : i32
    %c0_i32_1 = arith.constant 0 : i32
    %c0_i32_2 = arith.constant 0 : i32
    return %c0_i32, %c0_i32_0, %c0_i32_1 : i32, i32, i32
  }
  func.func @transform_2(%arg0: i32) -> (i32, i32) {
    %c0_i32 = arith.constant 0 : i32
    %c0_i32_0 = arith.constant 0 : i32
    %c0_i32_1 = arith.constant 0 : i32
    return %c0_i32, %c0_i32_0 : i32, i32
  }
  func.func @transform_3(%arg0: i32) -> (i32, i32) {
    %c0_i32 = arith.constant 0 : i32
    %c0_i32_0 = arith.constant 0 : i32
    %c0_i32_1 = arith.constant 0 : i32
    return %c0_i32, %c0_i32_0 : i32, i32
  }
  func.func @transform_4(%arg0: i32) -> (i32, i32, i32) {
    %c0_i32 = arith.constant 0 : i32
    %c0_i32_0 = arith.constant 0 : i32
    %c0_i32_1 = arith.constant 0 : i32
    return %arg0, %c0_i32, %c0_i32_0 : i32, i32, i32
  }
  func.func @transform_5(%arg0: i32) -> (i32, i32) {
    %c0_i32 = arith.constant 0 : i32
    %c0_i32_0 = arith.constant 0 : i32
    %c0_i32_1 = arith.constant 0 : i32
    return %c0_i32, %c0_i32_0 : i32, i32
  }
  func.func @transform_6(%arg0: i32) -> (i32, i32) {
    %c0_i32 = arith.constant 0 : i32
    %c0_i32_0 = arith.constant 0 : i32
    %c0_i32_1 = arith.constant 0 : i32
    return %c0_i32, %c0_i32_0 : i32, i32
  }
}

</mosaic_0001>

<llo_original>
// kernel: resnet_block.5
$region0: #{resnet_block.5}
  #allocation0 [shape = 'u32[]', space=smem, size = 0x4, offset = 0x4, fixed_abs, tag = 'smem constant byte address 0x4 - core index']
  #allocation1 [shape = 'u32[144,128]{1,0:T(1,128)}', space=vmem, size = 0x12000, scoped, tag = 'internal scratch']
  %s0 = inlined_call_operand.vmem [shape: f32[2,8,64], index: 0, kind: input, shape index: {}]
  %s1 = inlined_call_operand.vmem [shape: f32[2,8,64], index: 1, kind: input, shape index: {}]
  %s2 = inlined_call_operand.vmem [shape: f32[8,1], index: 2, kind: input, shape index: {}]
  %s3 = inlined_call_operand.vmem [shape: f32[8,1], index: 3, kind: input, shape index: {}]
  %s4 = inlined_call_operand.hbm [shape: f32[2,8,64], index: 4, kind: output, shape index: {}]
  %s5 = sld [smem:[#allocation0]]
  $region49: #{resnet_block.5} parent=0
    _
  %s7 = ssub.s32 1, %s5
  %s8 = scalar_select 0, %s7, %s5
  $region1: #{resnet_block.5} parent=0
    #allocation2 [shape = 'u8[8192]{0}', space=vmem, size = 0x2000, scoped, tag = 'output window, operand 0']
    #allocation3 [shape = 's32[2]{0}', space=sflag, size = 0x8, scoped, tag = 'scoped memory for resnet_block.5']
    %9 = vsyncpa [#allocation3], 0
    %s10 = scalar_lea.sflag [#allocation3], 1
    %11 = vsyncpa %s10, 0
    loop: start=0, step=1, limit=4
    $region2: #{resnet_block.5} parent=1 // loop_pre_header
      _
    $region3: #{resnet_block.5} parent=1 // loop_header
      %s13 = sphi 0, %s17
      %p14 = scmp.ge.s32.totalorder %s13, 4
      %s23 = sphi 0, %s25
      %s26 = sphi 0, %s23
      %s27 = sphi 0, %s26
      %s43 = sphi 0, %s27
      %s49 = sphi 0, %s51
      %s52 = sphi 0, %s49
      %s53 = sphi 0, %s52
      %s69 = sphi 0, %s53
      %s73 = sphi 0, %s73
      %s75 = sphi 0, %s73
      %s76 = sphi 0, %s75
      %s90 = sphi 0, %s76
      %s94 = sphi 0, %s94
      %s96 = sphi 0, %s94
      %s97 = sphi 0, %s96
      %s111 = sphi 0, %s97
      %s117 = sphi 0, %s119
      %s120 = sphi 0, %s117
      %s121 = sphi 0, %s120
      %s137 = sphi 0, %s121
    $region4: #{resnet_block.5} parent=1 // loop_header_branch
      %16 = sbr.rel (%p14) target = $region8
    $region5: #{resnet_block.5} parent=1 // loop_body
      %s18 = ssub.s32 %s13, 1
      %s19 = ssub.s32 %s13, 2
      %s20 = sadd.s32 %s13, 1
      %s21 = ssub.s32 %s13, %s20
      %p22 = scmp.eq.s32.totalorder %s21, 0
      %s24 = sadd.s32 %s23, 1
      %s25 = scalar_select %p22, %s23, %s24
      %p28 = pneg %p22
      %p29 = scmp.eq.s32.totalorder %s13, 1
      %p30 = por %p28, %p29
      %p31 = scmp.ne.s32.totalorder %s23, %s26
      %p32 = scmp.eq.s32.totalorder %s13, 0
      %p33 = por %p31, %p32
      %p34 = scmp.ne.s32.totalorder %s23, %s26
      %p35 = scmp.eq.s32.totalorder %s18, 1
      %p36 = por %p34, %p35
      %p37 = scmp.ne.s32.totalorder %s26, %s27
      %p38 = scmp.eq.s32.totalorder %s18, 0
      %p39 = por %p37, %p38
      %p40 = scmp.ne.s32.totalorder %s26, %s27
      %p41 = scmp.eq.s32.totalorder %s19, 1
      %p42 = por %p40, %p41
      %p44 = scmp.ne.s32.totalorder %s27, %s43
      %p45 = scmp.eq.s32.totalorder %s19, 0
      %p46 = por %p44, %p45
      %s47 = ssub.s32 %s13, %s20
      %p48 = scmp.eq.s32.totalorder %s47, 0
      %s50 = sadd.s32 %s49, 1
      %s51 = scalar_select %p48, %s49, %s50
      %p54 = pneg %p48
      %p55 = scmp.eq.s32.totalorder %s13, 1
      %p56 = por %p54, %p55
      %p57 = scmp.ne.s32.totalorder %s49, %s52
      %p58 = scmp.eq.s32.totalorder %s13, 0
      %p59 = por %p57, %p58
      %p60 = scmp.ne.s32.totalorder %s49, %s52
      %p61 = scmp.eq.s32.totalorder %s18, 1
      %p62 = por %p60, %p61
      %p63 = scmp.ne.s32.totalorder %s52, %s53
      %p64 = scmp.eq.s32.totalorder %s18, 0
      %p65 = por %p63, %p64
      %p66 = scmp.ne.s32.totalorder %s52, %s53
      %p67 = scmp.eq.s32.totalorder %s19, 1
      %p68 = por %p66, %p67
      %p70 = scmp.ne.s32.totalorder %s53, %s69
      %p71 = scmp.eq.s32.totalorder %s19, 0
      %p72 = por %p70, %p71
      %s74 = sadd.s32 %s73, 1
      %p77 = scmp.eq.s32.totalorder %s13, 1
      %p78 = scmp.ne.s32.totalorder %s73, %s75
      %p79 = scmp.eq.s32.totalorder %s13, 0
      %p80 = por %p78, %p79
      %p81 = scmp.ne.s32.totalorder %s73, %s75
      %p82 = scmp.eq.s32.totalorder %s18, 1
      %p83 = por %p81, %p82
      %p84 = scmp.ne.s32.totalorder %s75, %s76
      %p85 = scmp.eq.s32.totalorder %s18, 0
      %p86 = por %p84, %p85
      %p87 = scmp.ne.s32.totalorder %s75, %s76
      %p88 = scmp.eq.s32.totalorder %s19, 1
      %p89 = por %p87, %p88
      %p91 = scmp.ne.s32.totalorder %s76, %s90
      %p92 = scmp.eq.s32.totalorder %s19, 0
      %p93 = por %p91, %p92
      %s95 = sadd.s32 %s94, 1
      %p98 = scmp.eq.s32.totalorder %s13, 1
      %p99 = scmp.ne.s32.totalorder %s94, %s96
      %p100 = scmp.eq.s32.totalorder %s13, 0
      %p101 = por %p99, %p100
      %p102 = scmp.ne.s32.totalorder %s94, %s96
      %p103 = scmp.eq.s32.totalorder %s18, 1
      %p104 = por %p102, %p103
      %p105 = scmp.ne.s32.totalorder %s96, %s97
      %p106 = scmp.eq.s32.totalorder %s18, 0
      %p107 = por %p105, %p106
      %p108 = scmp.ne.s32.totalorder %s96, %s97
      %p109 = scmp.eq.s32.totalorder %s19, 1
      %p110 = por %p108, %p109
      %p112 = scmp.ne.s32.totalorder %s97, %s111
      %p113 = scmp.eq.s32.totalorder %s19, 0
      %p114 = por %p112, %p113
      %s115 = ssub.s32 %s13, %s20
      %p116 = scmp.eq.s32.totalorder %s115, 0
      %s118 = sadd.s32 %s117, 1
      %s119 = scalar_select %p116, %s117, %s118
      %p122 = pneg %p116
      %p123 = scmp.eq.s32.totalorder %s13, 1
      %p124 = por %p122, %p123
      %p125 = scmp.ne.s32.totalorder %s117, %s120
      %p126 = scmp.eq.s32.totalorder %s13, 0
      %p127 = por %p125, %p126
      %p128 = scmp.ne.s32.totalorder %s117, %s120
      %p129 = scmp.eq.s32.totalorder %s18, 1
      %p130 = por %p128, %p129
      %p131 = scmp.ne.s32.totalorder %s120, %s121
      %p132 = scmp.eq.s32.totalorder %s18, 0
      %p133 = por %p131, %p132
      %p134 = scmp.ne.s32.totalorder %s120, %s121
      %p135 = scmp.eq.s32.totalorder %s19, 1
      %p136 = por %p134, %p135
      %p138 = scmp.ne.s32.totalorder %s121, %s137
      %p139 = scmp.eq.s32.totalorder %s19, 0
      %p140 = por %p138, %p139
      %p141 = scmp.le.s32.totalorder 1, %s13
      %p142 = scmp.lt.s32.totalorder %s13, 3
      %p143 = pnand %p141, %p142
      %p144 = pneg %p143
      // Predicated region
      $region9: #{resnet_block.5} parent=5 // pred_check
        _
      $region10: #{resnet_block.5} parent=5 // pred_check_branch
        %146 = sbr.rel (%p143) target = $region12
      $region11: #{resnet_block.5} parent=5 // pred_region
        %s147 = ssub.s32 %s13, 1
        // Predicated region
        $region13: #{resnet_block.5} parent=11 // pred_check
          %p148 = pneg %p86
        $region14: #{resnet_block.5} parent=11 // pred_check_branch
          %150 = sbr.rel (%p148) target = $region16
        $region15: #{resnet_block.5} parent=11 // pred_region
          _
        $region16: #{resnet_block.5} parent=11 // pred_fallthru
          _
        // Predicated region
        $region17: #{resnet_block.5} parent=11 // pred_check
          %p151 = pneg %p107
        $region18: #{resnet_block.5} parent=11 // pred_check_branch
          %153 = sbr.rel (%p151) target = $region20
        $region19: #{resnet_block.5} parent=11 // pred_region
          _
        $region20: #{resnet_block.5} parent=11 // pred_fallthru
          _
      $region12: #{resnet_block.5} parent=5 // pred_fallthru
        _
      %p154 = scmp.lt.s32.totalorder %s13, 2
      // Predicated region
      $region21: #{resnet_block.5} parent=5 // pred_check
        %p155 = pneg %p154
      $region22: #{resnet_block.5} parent=5 // pred_check_branch
        %157 = sbr.rel (%p155) target = $region24
      $region23: #{resnet_block.5} parent=5 // pred_region
        // Predicated region
        $region25: #{resnet_block.5} parent=23 // pred_check
          %p158 = pneg %p33
        $region26: #{resnet_block.5} parent=23 // pred_check_branch
          %160 = sbr.rel (%p158) target = $region28
        $region27: #{resnet_block.5} parent=23 // pred_region
          %p161 = scmp.lt.s32.totalorder %s13, 1
          %s162 = scalar_select %p161, %s13, 1
          %s163 = smul.addr %s162, 8
          %s164 = scalar_lea.vmem %s0, %s163
        $region28: #{resnet_block.5} parent=23 // pred_fallthru
          _
        // Predicated region
        $region29: #{resnet_block.5} parent=23 // pred_check
          %p165 = pneg %p59
        $region30: #{resnet_block.5} parent=23 // pred_check_branch
          %167 = sbr.rel (%p165) target = $region32
        $region31: #{resnet_block.5} parent=23 // pred_region
          %p168 = scmp.lt.s32.totalorder %s13, 1
          %s169 = scalar_select %p168, %s13, 1
          %s170 = smul.addr %s169, 8
          %s171 = scalar_lea.vmem %s1, %s170
        $region32: #{resnet_block.5} parent=23 // pred_fallthru
          _
      $region24: #{resnet_block.5} parent=5 // pred_fallthru
        _
      %p172 = scmp.le.s32.totalorder 1, %s13
      %p173 = scmp.lt.s32.totalorder %s13, 3
      %p174 = pnand %p172, %p173
      %p175 = pneg %p174
      // Predicated region
      $region33: #{resnet_block.5} parent=5 // pred_check
        _
      $region34: #{resnet_block.5} parent=5 // pred_check_branch
        %177 = sbr.rel (%p174) target = $region36
      $region35: #{resnet_block.5} parent=5 // pred_region
        %s178 = ssub.s32 %s13, 1
        %p179 = scmp.lt.s32.totalorder %s18, 1
        %s180 = scalar_select %p179, %s18, 1
        %s181 = smul.addr %s180, 8
        %s182 = scalar_lea.vmem %s0, %s181
        %p183 = pneg %p39
        %p184 = pneg %p36
        %p185 = scmp.lt.s32.totalorder %s18, 1
        %s186 = scalar_select %p185, %s18, 1
        %s187 = smul.addr %s186, 8
        %s188 = scalar_lea.vmem %s1, %s187
        %p189 = pneg %p65
        %p190 = pneg %p62
        %p191 = pneg %p86
        %p192 = pneg %p83
        %p193 = pneg %p107
        %p194 = pneg %p104
        %p195 = pneg %p133
        %p196 = pneg %p130
        %s197 = sand.u32 %s120, 1
        %s198 = scalar_lea.sflag [#allocation3], %s197
        %s199 = sand.u32 %s120, 1
        %s200 = smul.addr %s199, 8
        %s201 = scalar_lea.vmem [#allocation2], %s200
        %p202 = scmp.lt.s32.totalorder %s18, 1
        %s203 = scalar_select %p202, %s18, 1
        %s204 = smul.addr %s203, 8
        %s205 = scalar_lea.vmem %s0, %s204
        %p206 = scmp.lt.s32.totalorder %s18, 1
        %s207 = scalar_select %p206, %s18, 1
        %s208 = smul.addr %s207, 8
        %s209 = scalar_lea.vmem %s1, %s208
        %v210 = vld [vmem:[%s205] sm:$0xff]
        %v211 = vld [vmem:[%s209] sm:$0xff]
        %v212 = vld [vmem:[%s2] sm:$0xff]
        %214 = vset.pattern.permute.xlu0 0
        %215 = vperm.xlu0 %214, %v212
        %v216 = vpop.permute.xlu0 %215
        %v218 = vmul.f32 %v211, %v216
        %v219 = vadd.f32 %v210, %v218
        %v220 = vld [vmem:[%s3] sm:$0xff]
        %222 = vset.pattern.permute.xlu0 0
        %223 = vperm.xlu0 %222, %v220
        %v224 = vpop.permute.xlu0 %223
        %v226 = vadd.f32 %v219, %v224
        %vm227 = vcmask 523264
        %228 = vst.msk [vmem:[%s201] sm:$0xff] %vm227, %v226
        %s229 = sand.u32 %s120, 1
        %s230 = scalar_lea.sflag [#allocation3], %s229
        %s231 = sand.u32 %s120, 1
        %s232 = smul.addr %s231, 8
        %s233 = scalar_lea.vmem [#allocation2], %s232
        // Predicated region
        $region37: #{resnet_block.5} parent=35 // pred_check
          %p234 = pneg %p130
        $region38: #{resnet_block.5} parent=35 // pred_check_branch
          %236 = sbr.rel (%p234) target = $region40
        $region39: #{resnet_block.5} parent=35 // pred_region
          %s238 = ssub.s32 128, 128
          %239 = vsyncadd %s230, %s238
          %s240 = smul.addr %s18, 128
          %s241 = scalar_lea.hbm %s4, %s240
          %s243 = sshll.u32 %s233, 4
          %s244 = int_to_ptr.vmem [resolvable:$true] %s243
          %246 = dma.vmem_to_hbm [thread:$0]  %s244, 128, %s241, %s230
        $region40: #{resnet_block.5} parent=35 // pred_fallthru
          _
      $region36: #{resnet_block.5} parent=5 // pred_fallthru
        _
      %p247 = scmp.le.s32.totalorder 2, %s13
      // Predicated region
      $region41: #{resnet_block.5} parent=5 // pred_check
        %p248 = pneg %p247
      $region42: #{resnet_block.5} parent=5 // pred_check_branch
        %250 = sbr.rel (%p248) target = $region44
      $region43: #{resnet_block.5} parent=5 // pred_region
        %s251 = ssub.s32 %s13, 2
        // Predicated region
        $region45: #{resnet_block.5} parent=43 // pred_check
          %p252 = pneg %p136
        $region46: #{resnet_block.5} parent=43 // pred_check_branch
          %254 = sbr.rel (%p252) target = $region48
        $region47: #{resnet_block.5} parent=43 // pred_region
          %s255 = sand.u32 %s121, 1
          %s256 = scalar_lea.sflag [#allocation3], %s255
          %s257 = sand.u32 %s121, 1
          %s258 = smul.addr %s257, 8
          %s259 = scalar_lea.vmem [#allocation2], %s258
          %260 = dma.done %s256, 128
        $region48: #{resnet_block.5} parent=43 // pred_fallthru
          _
      $region44: #{resnet_block.5} parent=5 // pred_fallthru
        _
    $region6: #{resnet_block.5} parent=1 // loop_footer
      %s17 = sadd.s32 1, %s13
    $region7: #{resnet_block.5} parent=1 // loop_footer_branch
      %12 = sbr.rel target = $region3
    $region8: #{resnet_block.5} parent=1 // loop_exit
      _
    %261 = vsyncpa [#allocation3], 1
    %s262 = scalar_lea.sflag [#allocation3], 1
    %263 = vsyncpa %s262, 1

// kernel: resnet_block.4
$region0: #{resnet_block.4}
  #allocation0 [shape = 'u32[]', space=smem, size = 0x4, offset = 0x4, fixed_abs, tag = 'smem constant byte address 0x4 - core index']
  #allocation1 [shape = 'u32[144,128]{1,0:T(1,128)}', space=vmem, size = 0x12000, scoped, tag = 'internal scratch']
  %s0 = inlined_call_operand.vmem [shape: f32[2,8,64], index: 0, kind: input, shape index: {}]
  %s1 = inlined_call_operand.vmem [shape: f32[3,8,8], index: 1, kind: input, shape index: {}]
  %s2 = inlined_call_operand.vmem [shape: f32[8,1], index: 2, kind: input, shape index: {}]
  %s3 = inlined_call_operand.vmem [shape: f32[8,1], index: 3, kind: input, shape index: {}]
  %s4 = inlined_call_operand.vmem [shape: f32[2,8,64], index: 4, kind: output, shape index: {0}]
  %s5 = inlined_call_operand.vmem [shape: f32[8,1], index: 5, kind: output, shape index: {1}]
  %s6 = inlined_call_operand.vmem [shape: f32[8,1], index: 6, kind: output, shape index: {2}]
  %7 = xla_tuple %s4, %s5, %s6
  %s8 = sld [smem:[#allocation0]]
  $region69: #{resnet_block.4} parent=0
    _
  %s10 = ssub.s32 1, %s8
  %s11 = scalar_select 0, %s10, %s8
  loop: start=0, step=1, limit=4
  $region2: #{resnet_block.4} parent=0 // loop_pre_header
    _
  $region3: #{resnet_block.4} parent=0 // loop_header
    %s13 = sphi 0, %s17
    %p14 = scmp.ge.s32.totalorder %s13, 4
    %s23 = sphi 0, %s25
    %s26 = sphi 0, %s23
    %s27 = sphi 0, %s26
    %s43 = sphi 0, %s27
    %s47 = sphi 0, %s47
    %s49 = sphi 0, %s47
    %s50 = sphi 0, %s49
    %s64 = sphi 0, %s50
    %s68 = sphi 0, %s68
    %s70 = sphi 0, %s68
    %s71 = sphi 0, %s70
    %s85 = sphi 0, %s71
    %s89 = sphi 0, %s89
    %s91 = sphi 0, %s89
    %s92 = sphi 0, %s91
    %s106 = sphi 0, %s92
    %s112 = sphi 0, %s114
    %s115 = sphi 0, %s112
    %s116 = sphi 0, %s115
    %s132 = sphi 0, %s116
    %s136 = sphi 0, %s136
    %s138 = sphi 0, %s136
    %s139 = sphi 0, %s138
    %s153 = sphi 0, %s139
    %s157 = sphi 0, %s157
    %s159 = sphi 0, %s157
    %s160 = sphi 0, %s159
    %s174 = sphi 0, %s160
  $region4: #{resnet_block.4} parent=0 // loop_header_branch
    %16 = sbr.rel (%p14) target = $region8
  $region5: #{resnet_block.4} parent=0 // loop_body
    %s18 = ssub.s32 %s13, 1
    %s19 = ssub.s32 %s13, 2
    %s20 = sadd.s32 %s13, 1
    %s21 = ssub.s32 %s13, %s20
    %p22 = scmp.eq.s32.totalorder %s21, 0
    %s24 = sadd.s32 %s23, 1
    %s25 = scalar_select %p22, %s23, %s24
    %p28 = pneg %p22
    %p29 = scmp.eq.s32.totalorder %s13, 1
    %p30 = por %p28, %p29
    %p31 = scmp.ne.s32.totalorder %s23, %s26
    %p32 = scmp.eq.s32.totalorder %s13, 0
    %p33 = por %p31, %p32
    %p34 = scmp.ne.s32.totalorder %s23, %s26
    %p35 = scmp.eq.s32.totalorder %s18, 1
    %p36 = por %p34, %p35
    %p37 = scmp.ne.s32.totalorder %s26, %s27
    %p38 = scmp.eq.s32.totalorder %s18, 0
    %p39 = por %p37, %p38
    %p40 = scmp.ne.s32.totalorder %s26, %s27
    %p41 = scmp.eq.s32.totalorder %s19, 1
    %p42 = por %p40, %p41
    %p44 = scmp.ne.s32.totalorder %s27, %s43
    %p45 = scmp.eq.s32.totalorder %s19, 0
    %p46 = por %p44, %p45
    %s48 = sadd.s32 %s47, 1
    %p51 = scmp.eq.s32.totalorder %s13, 1
    %p52 = scmp.ne.s32.totalorder %s47, %s49
    %p53 = scmp.eq.s32.totalorder %s13, 0
    %p54 = por %p52, %p53
    %p55 = scmp.ne.s32.totalorder %s47, %s49
    %p56 = scmp.eq.s32.totalorder %s18, 1
    %p57 = por %p55, %p56
    %p58 = scmp.ne.s32.totalorder %s49, %s50
    %p59 = scmp.eq.s32.totalorder %s18, 0
    %p60 = por %p58, %p59
    %p61 = scmp.ne.s32.totalorder %s49, %s50
    %p62 = scmp.eq.s32.totalorder %s19, 1
    %p63 = por %p61, %p62
    %p65 = scmp.ne.s32.totalorder %s50, %s64
    %p66 = scmp.eq.s32.totalorder %s19, 0
    %p67 = por %p65, %p66
    %s69 = sadd.s32 %s68, 1
    %p72 = scmp.eq.s32.totalorder %s13, 1
    %p73 = scmp.ne.s32.totalorder %s68, %s70
    %p74 = scmp.eq.s32.totalorder %s13, 0
    %p75 = por %p73, %p74
    %p76 = scmp.ne.s32.totalorder %s68, %s70
    %p77 = scmp.eq.s32.totalorder %s18, 1
    %p78 = por %p76, %p77
    %p79 = scmp.ne.s32.totalorder %s70, %s71
    %p80 = scmp.eq.s32.totalorder %s18, 0
    %p81 = por %p79, %p80
    %p82 = scmp.ne.s32.totalorder %s70, %s71
    %p83 = scmp.eq.s32.totalorder %s19, 1
    %p84 = por %p82, %p83
    %p86 = scmp.ne.s32.totalorder %s71, %s85
    %p87 = scmp.eq.s32.totalorder %s19, 0
    %p88 = por %p86, %p87
    %s90 = sadd.s32 %s89, 1
    %p93 = scmp.eq.s32.totalorder %s13, 1
    %p94 = scmp.ne.s32.totalorder %s89, %s91
    %p95 = scmp.eq.s32.totalorder %s13, 0
    %p96 = por %p94, %p95
    %p97 = scmp.ne.s32.totalorder %s89, %s91
    %p98 = scmp.eq.s32.totalorder %s18, 1
    %p99 = por %p97, %p98
    %p100 = scmp.ne.s32.totalorder %s91, %s92
    %p101 = scmp.eq.s32.totalorder %s18, 0
    %p102 = por %p100, %p101
    %p103 = scmp.ne.s32.totalorder %s91, %s92
    %p104 = scmp.eq.s32.totalorder %s19, 1
    %p105 = por %p103, %p104
    %p107 = scmp.ne.s32.totalorder %s92, %s106
    %p108 = scmp.eq.s32.totalorder %s19, 0
    %p109 = por %p107, %p108
    %s110 = ssub.s32 %s13, %s20
    %p111 = scmp.eq.s32.totalorder %s110, 0
    %s113 = sadd.s32 %s112, 1
    %s114 = scalar_select %p111, %s112, %s113
    %p117 = pneg %p111
    %p118 = scmp.eq.s32.totalorder %s13, 1
    %p119 = por %p117, %p118
    %p120 = scmp.ne.s32.totalorder %s112, %s115
    %p121 = scmp.eq.s32.totalorder %s13, 0
    %p122 = por %p120, %p121
    %p123 = scmp.ne.s32.totalorder %s112, %s115
    %p124 = scmp.eq.s32.totalorder %s18, 1
    %p125 = por %p123, %p124
    %p126 = scmp.ne.s32.totalorder %s115, %s116
    %p127 = scmp.eq.s32.totalorder %s18, 0
    %p128 = por %p126, %p127
    %p129 = scmp.ne.s32.totalorder %s115, %s116
    %p130 = scmp.eq.s32.totalorder %s19, 1
    %p131 = por %p129, %p130
    %p133 = scmp.ne.s32.totalorder %s116, %s132
    %p134 = scmp.eq.s32.totalorder %s19, 0
    %p135 = por %p133, %p134
    %s137 = sadd.s32 %s136, 1
    %p140 = scmp.eq.s32.totalorder %s13, 1
    %p141 = scmp.ne.s32.totalorder %s136, %s138
    %p142 = scmp.eq.s32.totalorder %s13, 0
    %p143 = por %p141, %p142
    %p144 = scmp.ne.s32.totalorder %s136, %s138
    %p145 = scmp.eq.s32.totalorder %s18, 1
    %p146 = por %p144, %p145
    %p147 = scmp.ne.s32.totalorder %s138, %s139
    %p148 = scmp.eq.s32.totalorder %s18, 0
    %p149 = por %p147, %p148
    %p150 = scmp.ne.s32.totalorder %s138, %s139
    %p151 = scmp.eq.s32.totalorder %s19, 1
    %p152 = por %p150, %p151
    %p154 = scmp.ne.s32.totalorder %s139, %s153
    %p155 = scmp.eq.s32.totalorder %s19, 0
    %p156 = por %p154, %p155
    %s158 = sadd.s32 %s157, 1
    %p161 = scmp.eq.s32.totalorder %s13, 1
    %p162 = scmp.ne.s32.totalorder %s157, %s159
    %p163 = scmp.eq.s32.totalorder %s13, 0
    %p164 = por %p162, %p163
    %p165 = scmp.ne.s32.totalorder %s157, %s159
    %p166 = scmp.eq.s32.totalorder %s18, 1
    %p167 = por %p165, %p166
    %p168 = scmp.ne.s32.totalorder %s159, %s160
    %p169 = scmp.eq.s32.totalorder %s18, 0
    %p170 = por %p168, %p169
    %p171 = scmp.ne.s32.totalorder %s159, %s160
    %p172 = scmp.eq.s32.totalorder %s19, 1
    %p173 = por %p171, %p172
    %p175 = scmp.ne.s32.totalorder %s160, %s174
    %p176 = scmp.eq.s32.totalorder %s19, 0
    %p177 = por %p175, %p176
    %p178 = scmp.le.s32.totalorder 1, %s13
    %p179 = scmp.lt.s32.totalorder %s13, 3
    %p180 = pnand %p178, %p179
    %p181 = pneg %p180
    // Predicated region
    $region9: #{resnet_block.4} parent=5 // pred_check
      _
    $region10: #{resnet_block.4} parent=5 // pred_check_branch
      %183 = sbr.rel (%p180) target = $region12
    $region11: #{resnet_block.4} parent=5 // pred_region
      %s184 = ssub.s32 %s13, 1
      // Predicated region
      $region13: #{resnet_block.4} parent=11 // pred_check
        %p185 = pneg %p60
      $region14: #{resnet_block.4} parent=11 // pred_check_branch
        %187 = sbr.rel (%p185) target = $region16
      $region15: #{resnet_block.4} parent=11 // pred_region
        _
      $region16: #{resnet_block.4} parent=11 // pred_fallthru
        _
      // Predicated region
      $region17: #{resnet_block.4} parent=11 // pred_check
        %p188 = pneg %p81
      $region18: #{resnet_block.4} parent=11 // pred_check_branch
        %190 = sbr.rel (%p188) target = $region20
      $region19: #{resnet_block.4} parent=11 // pred_region
        _
      $region20: #{resnet_block.4} parent=11 // pred_fallthru
        _
      // Predicated region
      $region21: #{resnet_block.4} parent=11 // pred_check
        %p191 = pneg %p102
      $region22: #{resnet_block.4} parent=11 // pred_check_branch
        %193 = sbr.rel (%p191) target = $region24
      $region23: #{resnet_block.4} parent=11 // pred_region
        _
      $region24: #{resnet_block.4} parent=11 // pred_fallthru
        _
    $region12: #{resnet_block.4} parent=5 // pred_fallthru
      _
    %p194 = scmp.lt.s32.totalorder %s13, 2
    // Predicated region
    $region25: #{resnet_block.4} parent=5 // pred_check
      %p195 = pneg %p194
    $region26: #{resnet_block.4} parent=5 // pred_check_branch
      %197 = sbr.rel (%p195) target = $region28
    $region27: #{resnet_block.4} parent=5 // pred_region
      // Predicated region
      $region29: #{resnet_block.4} parent=27 // pred_check
        %p198 = pneg %p33
      $region30: #{resnet_block.4} parent=27 // pred_check_branch
        %200 = sbr.rel (%p198) target = $region32
      $region31: #{resnet_block.4} parent=27 // pred_region
        %p201 = scmp.lt.s32.totalorder %s13, 1
        %s202 = scalar_select %p201, %s13, 1
        %s203 = smul.addr %s202, 8
        %s204 = scalar_lea.vmem %s0, %s203
      $region32: #{resnet_block.4} parent=27 // pred_fallthru
        _
    $region28: #{resnet_block.4} parent=5 // pred_fallthru
      _
    %p205 = scmp.le.s32.totalorder 1, %s13
    %p206 = scmp.lt.s32.totalorder %s13, 3
    %p207 = pnand %p205, %p206
    %p208 = pneg %p207
    // Predicated region
    $region33: #{resnet_block.4} parent=5 // pred_check
      _
    $region34: #{resnet_block.4} parent=5 // pred_check_branch
      %210 = sbr.rel (%p207) target = $region36
    $region35: #{resnet_block.4} parent=5 // pred_region
      %s211 = ssub.s32 %s13, 1
      %p212 = scmp.lt.s32.totalorder %s18, 1
      %s213 = scalar_select %p212, %s18, 1
      %s214 = smul.addr %s213, 8
      %s215 = scalar_lea.vmem %s0, %s214
      %p216 = pneg %p39
      %p217 = pneg %p36
      %p218 = pneg %p60
      %p219 = pneg %p57
      %p220 = pneg %p81
      %p221 = pneg %p78
      %p222 = pneg %p102
      %p223 = pneg %p99
      %p224 = pneg %p128
      %p225 = pneg %p125
      %p226 = scmp.lt.s32.totalorder %s18, 1
      %s227 = scalar_select %p226, %s18, 1
      %s228 = smul.addr %s227, 8
      %s229 = scalar_lea.vmem %s4, %s228
      %p230 = pneg %p149
      %p231 = pneg %p146
      %p232 = pneg %p170
      %p233 = pneg %p167
      %p234 = scmp.lt.s32.totalorder %s18, 1
      %s235 = scalar_select %p234, %s18, 1
      %s236 = smul.addr %s235, 8
      %s237 = scalar_lea.vmem %s0, %s236
      %p238 = scmp.lt.s32.totalorder %s18, 1
      %s239 = scalar_select %p238, %s18, 1
      %s240 = smul.addr %s239, 8
      %s241 = scalar_lea.vmem %s4, %s240
      %v242 = vld [vmem:[%s237] sm:$0xff]
      %v243 = vld [vmem:[%s2] sm:$0xff]
      %245 = vset.pattern.permute.xlu0 0
      %246 = vperm.xlu0 %245, %v243
      %v247 = vpop.permute.xlu0 %246
      %v249 = vmul.f32 %v242, %v247
      %v250 = vld [vmem:[%s3] sm:$0xff]
      %252 = vset.pattern.permute.xlu0 0
      %253 = vperm.xlu0 %252, %v250
      %v254 = vpop.permute.xlu0 %253
      %v256 = vadd.f32 %v249, %v254
      %v257 = vmax.f32 %v256, 0.0
      %v258 = vlaneseq
      %v259 = vand.u32 %v258, 127
      %vm260 = vcmask 1048064
      %261 = vrot.lane.b32.xlu0 %v257, 64
      %v262 = vpop.permute.xlu0 %261
      %v263 = vsel %vm260, %v262, %v257
      %264 = vrot.lane.b32.xlu0 %v263, 64
      %v265 = vpop.permute.xlu0 %264
      %v266 = vsel %vm260, %v265, %v257
      %vm267 = vcmp.eq.s32.totalorder %v259, 0
      %v268 = vsel %vm267, 1, 0
      %vm269 = vcmp.eq.s32.totalorder %v268, 1
      %271 = vrot.lane.b32.xlu0 %v266, 127
      %v272 = vpop.permute.xlu0 %271
      %274 = vrot.lane.b32.xlu0 %v266, 65
      %v275 = vpop.permute.xlu0 %274
      %v277 = vsel %vm269, %v272, %v275
      %vm278 = vcmp.eq.s32.totalorder %v259, 63
      %v279 = vsel %vm278, 1, 0
      %vm280 = vcmp.eq.s32.totalorder %v279, 1
      %v281 = vsel %vm280, %v275, %v272
      %s282 = scalar_lea.vmem %s1, 8
      %v283 = vld [vmem:[%s282] sm:$0xff]
      %v284 = vld [vmem:[%s1] sm:$0xff]
      %vm285 = vcmask 64512
      %v287 = vsel %vm285, %v284, 0
      %289 = vmatprep.subr.mxu0 0.0
      %290 = vmatpush1.msra.mxu0 0.0
      %291 = vmatprep.subr.mxu0 0.0
      %292 = vmatpush1.msra.mxu0 0.0
      %293 = vmatprep.subr.mxu0 0.0
      %294 = vmatpush1.msra.mxu0 0.0
      %295 = vmatprep.subr.mxu0 0.0
      %296 = vmatpush1.msra.mxu0 0.0
      %297 = vmatprep.subr.mxu0 0.0
      %298 = vmatpush1.msra.mxu0 0.0
      %299 = vmatprep.subr.mxu0 0.0
      %300 = vmatpush1.msra.mxu0 0.0
      %301 = vmatprep.subr.mxu0 0.0
      %302 = vmatpush1.msra.mxu0 0.0
      %303 = vmatprep.subr.mxu0 0.0
      %304 = vmatpush1.msra.mxu0 0.0
      %305 = vmatprep.subr.mxu0 0.0
      %306 = vmatpush1.msra.mxu0 0.0
      %307 = vmatprep.subr.mxu0 0.0
      %308 = vmatpush1.msra.mxu0 0.0
      %309 = vmatprep.subr.mxu0 0.0
      %310 = vmatpush1.msra.mxu0 0.0
      %311 = vmatprep.subr.mxu0 0.0
      %312 = vmatpush1.msra.mxu0 0.0
      %313 = vmatprep.subr.mxu0 0.0
      %314 = vmatpush1.msra.mxu0 0.0
      %315 = vmatprep.subr.mxu0 0.0
      %316 = vmatpush1.msra.mxu0 0.0
      %317 = vmatprep.subr.mxu0 0.0
      %318 = vmatpush1.msra.mxu0 0.0
      %319 = vmatprep.subr.mxu0 0.0
      %320 = vmatpush1.msra.mxu0 %v277
      %321 = vmatprep.subr.mxu0 0.0
      %322 = vmatpush2.msra.mxu0 0.0
      %323 = vmatprep.subr.mxu0 0.0
      %324 = vmatpush2.msra.mxu0 0.0
      %325 = vmatprep.subr.mxu0 0.0
      %326 = vmatpush2.msra.mxu0 0.0
      %327 = vmatprep.subr.mxu0 0.0
      %328 = vmatpush2.msra.mxu0 0.0
      %329 = vmatprep.subr.mxu0 0.0
      %330 = vmatpush2.msra.mxu0 0.0
      %331 = vmatprep.subr.mxu0 0.0
      %332 = vmatpush2.msra.mxu0 0.0
      %333 = vmatprep.subr.mxu0 0.0
      %334 = vmatpush2.msra.mxu0 0.0
      %335 = vmatprep.subr.mxu0 0.0
      %336 = vmatpush2.msra.mxu0 0.0
      %337 = vmatprep.subr.mxu0 0.0
      %338 = vmatpush2.msra.mxu0 0.0
      %339 = vmatprep.subr.mxu0 0.0
      %340 = vmatpush2.msra.mxu0 0.0
      %341 = vmatprep.subr.mxu0 0.0
      %342 = vmatpush2.msra.mxu0 0.0
      %343 = vmatprep.subr.mxu0 0.0
      %344 = vmatpush2.msra.mxu0 0.0
      %345 = vmatprep.subr.mxu0 0.0
      %346 = vmatpush2.msra.mxu0 0.0
      %347 = vmatprep.subr.mxu0 0.0
      %348 = vmatpush2.msra.mxu0 0.0
      %349 = vmatprep.subr.mxu0 0.0
      %350 = vmatpush2.msra.mxu0 0.0
      %351 = vmatprep.subr.mxu0 0.0
      %352 = vmatpush2.msra.mxu0 0.0
      %353 = vmatprep.mubr.f32.mxu0 0.0
      %354 = vmatmul.mubr.f32.gmra.mxu0 %v287
      %v355 = vpop.f32.mrf.mxu0
      %v356 = vadd.f32 0.0, %v355
      %v357 = vpop.f32.mrf.mxu0
      %358 = vdwg.mxu0
      %v360 = vsel %vm285, %v283, 0
      %362 = vmatprep.subr.mxu0 0.0
      %363 = vmatpush1.msra.mxu0 0.0
      %364 = vmatprep.subr.mxu0 0.0
      %365 = vmatpush1.msra.mxu0 0.0
      %366 = vmatprep.subr.mxu0 0.0
      %367 = vmatpush1.msra.mxu0 0.0
      %368 = vmatprep.subr.mxu0 0.0
      %369 = vmatpush1.msra.mxu0 0.0
      %370 = vmatprep.subr.mxu0 0.0
      %371 = vmatpush1.msra.mxu0 0.0
      %372 = vmatprep.subr.mxu0 0.0
      %373 = vmatpush1.msra.mxu0 0.0
      %374 = vmatprep.subr.mxu0 0.0
      %375 = vmatpush1.msra.mxu0 0.0
      %376 = vmatprep.subr.mxu0 0.0
      %377 = vmatpush1.msra.mxu0 0.0
      %378 = vmatprep.subr.mxu0 0.0
      %379 = vmatpush1.msra.mxu0 0.0
      %380 = vmatprep.subr.mxu0 0.0
      %381 = vmatpush1.msra.mxu0 0.0
      %382 = vmatprep.subr.mxu0 0.0
      %383 = vmatpush1.msra.mxu0 0.0
      %384 = vmatprep.subr.mxu0 0.0
      %385 = vmatpush1.msra.mxu0 0.0
      %386 = vmatprep.subr.mxu0 0.0
      %387 = vmatpush1.msra.mxu0 0.0
      %388 = vmatprep.subr.mxu0 0.0
      %389 = vmatpush1.msra.mxu0 0.0
      %390 = vmatprep.subr.mxu0 0.0
      %391 = vmatpush1.msra.mxu0 0.0
      %392 = vmatprep.subr.mxu0 0.0
      %393 = vmatpush1.msra.mxu0 %v257
      %394 = vmatprep.subr.mxu0 0.0
      %395 = vmatpush2.msra.mxu0 0.0
      %396 = vmatprep.subr.mxu0 0.0
      %397 = vmatpush2.msra.mxu0 0.0
      %398 = vmatprep.subr.mxu0 0.0
      %399 = vmatpush2.msra.mxu0 0.0
      %400 = vmatprep.subr.mxu0 0.0
      %401 = vmatpush2.msra.mxu0 0.0
      %402 = vmatprep.subr.mxu0 0.0
      %403 = vmatpush2.msra.mxu0 0.0
      %404 = vmatprep.subr.mxu0 0.0
      %405 = vmatpush2.msra.mxu0 0.0
      %406 = vmatprep.subr.mxu0 0.0
      %407 = vmatpush2.msra.mxu0 0.0
      %408 = vmatprep.subr.mxu0 0.0
      %409 = vmatpush2.msra.mxu0 0.0
      %410 = vmatprep.subr.mxu0 0.0
      %411 = vmatpush2.msra.mxu0 0.0
      %412 = vmatprep.subr.mxu0 0.0
      %413 = vmatpush2.msra.mxu0 0.0
      %414 = vmatprep.subr.mxu0 0.0
      %415 = vmatpush2.msra.mxu0 0.0
      %416 = vmatprep.subr.mxu0 0.0
      %417 = vmatpush2.msra.mxu0 0.0
      %418 = vmatprep.subr.mxu0 0.0
      %419 = vmatpush2.msra.mxu0 0.0
      %420 = vmatprep.subr.mxu0 0.0
      %421 = vmatpush2.msra.mxu0 0.0
      %422 = vmatprep.subr.mxu0 0.0
      %423 = vmatpush2.msra.mxu0 0.0
      %424 = vmatprep.subr.mxu0 0.0
      %425 = vmatpush2.msra.mxu0 0.0
      %426 = vmatprep.mubr.f32.mxu0 0.0
      %427 = vmatmul.mubr.f32.gmra.mxu0 %v360
      %v428 = vpop.f32.mrf.mxu0
      %v429 = vadd.f32 %v356, %v428
      %v430 = vpop.f32.mrf.mxu0
      %431 = vdwg.mxu0
      %s432 = scalar_lea.vmem %s1, 16
      %v433 = vld [vmem:[%s432] sm:$0xff]
      %v435 = vsel %vm285, %v433, 0
      %437 = vmatprep.subr.mxu0 0.0
      %438 = vmatpush1.msra.mxu0 0.0
      %439 = vmatprep.subr.mxu0 0.0
      %440 = vmatpush1.msra.mxu0 0.0
      %441 = vmatprep.subr.mxu0 0.0
      %442 = vmatpush1.msra.mxu0 0.0
      %443 = vmatprep.subr.mxu0 0.0
      %444 = vmatpush1.msra.mxu0 0.0
      %445 = vmatprep.subr.mxu0 0.0
      %446 = vmatpush1.msra.mxu0 0.0
      %447 = vmatprep.subr.mxu0 0.0
      %448 = vmatpush1.msra.mxu0 0.0
      %449 = vmatprep.subr.mxu0 0.0
      %450 = vmatpush1.msra.mxu0 0.0
      %451 = vmatprep.subr.mxu0 0.0
      %452 = vmatpush1.msra.mxu0 0.0
      %453 = vmatprep.subr.mxu0 0.0
      %454 = vmatpush1.msra.mxu0 0.0
      %455 = vmatprep.subr.mxu0 0.0
      %456 = vmatpush1.msra.mxu0 0.0
      %457 = vmatprep.subr.mxu0 0.0
      %458 = vmatpush1.msra.mxu0 0.0
      %459 = vmatprep.subr.mxu0 0.0
      %460 = vmatpush1.msra.mxu0 0.0
      %461 = vmatprep.subr.mxu0 0.0
      %462 = vmatpush1.msra.mxu0 0.0
      %463 = vmatprep.subr.mxu0 0.0
      %464 = vmatpush1.msra.mxu0 0.0
      %465 = vmatprep.subr.mxu0 0.0
      %466 = vmatpush1.msra.mxu0 0.0
      %467 = vmatprep.subr.mxu0 0.0
      %468 = vmatpush1.msra.mxu0 %v281
      %469 = vmatprep.subr.mxu0 0.0
      %470 = vmatpush2.msra.mxu0 0.0
      %471 = vmatprep.subr.mxu0 0.0
      %472 = vmatpush2.msra.mxu0 0.0
      %473 = vmatprep.subr.mxu0 0.0
      %474 = vmatpush2.msra.mxu0 0.0
      %475 = vmatprep.subr.mxu0 0.0
      %476 = vmatpush2.msra.mxu0 0.0
      %477 = vmatprep.subr.mxu0 0.0
      %478 = vmatpush2.msra.mxu0 0.0
      %479 = vmatprep.subr.mxu0 0.0
      %480 = vmatpush2.msra.mxu0 0.0
      %481 = vmatprep.subr.mxu0 0.0
      %482 = vmatpush2.msra.mxu0 0.0
      %483 = vmatprep.subr.mxu0 0.0
      %484 = vmatpush2.msra.mxu0 0.0
      %485 = vmatprep.subr.mxu0 0.0
      %486 = vmatpush2.msra.mxu0 0.0
      %487 = vmatprep.subr.mxu0 0.0
      %488 = vmatpush2.msra.mxu0 0.0
      %489 = vmatprep.subr.mxu0 0.0
      %490 = vmatpush2.msra.mxu0 0.0
      %491 = vmatprep.subr.mxu0 0.0
      %492 = vmatpush2.msra.mxu0 0.0
      %493 = vmatprep.subr.mxu0 0.0
      %494 = vmatpush2.msra.mxu0 0.0
      %495 = vmatprep.subr.mxu0 0.0
      %496 = vmatpush2.msra.mxu0 0.0
      %497 = vmatprep.subr.mxu0 0.0
      %498 = vmatpush2.msra.mxu0 0.0
      %499 = vmatprep.subr.mxu0 0.0
      %500 = vmatpush2.msra.mxu0 0.0
      %501 = vmatprep.mubr.f32.mxu0 0.0
      %502 = vmatmul.mubr.f32.gmra.mxu0 %v435
      %v503 = vpop.f32.mrf.mxu0
      %v504 = vadd.f32 0.0, %v503
      %v505 = vpop.f32.mrf.mxu0
      %506 = vdwg.mxu0
      %v507 = vadd.f32 %v429, %v504
      %vm508 = vcmask 523264
      %509 = vst.msk [vmem:[%s241] sm:$0xff] %vm508, %v507
      %p510 = scmp.eq.s32.totalorder %s18, 0
      // Predicated region
      $region37: #{resnet_block.4} parent=35 // pred_check
        %p511 = pneg %p510
      $region38: #{resnet_block.4} parent=35 // pred_check_branch
        %513 = sbr.rel (%p511) target = $region40
      $region39: #{resnet_block.4} parent=35 // pred_region
        %vm514 = vcmask 7168
        %515 = vst.msk [vmem:[%s5] sm:$0xff] %vm514, 0.0
        %516 = vst.msk [vmem:[%s6] sm:$0xff] %vm514, 0.0
      $region40: #{resnet_block.4} parent=35 // pred_fallthru
        _
      %v517 = vld [vmem:[%s5] sm:$0xff]
      %v518 = vsel %vm508, %v507, 0.0
      %519 = vadd.xlane.f32.xlu0 %v518
      %v520 = vpop.xlane.xlu0 %519
      %v521 = vadd.f32 %v517, %v520
      %vm522 = vcmask 7168
      %523 = vst.msk [vmem:[%s5] sm:$0xff] %vm522, %v521
      %v524 = vld [vmem:[%s6] sm:$0xff]
      %v525 = vmul.f32 %v507, %v507
      %v526 = vsel %vm508, %v525, 0.0
      %527 = vadd.xlane.f32.xlu0 %v526
      %v528 = vpop.xlane.xlu0 %527
      %v529 = vadd.f32 %v524, %v528
      %530 = vst.msk [vmem:[%s6] sm:$0xff] %vm522, %v529
      %p531 = scmp.lt.s32.totalorder %s18, 1
      %s532 = scalar_select %p531, %s18, 1
      %s533 = smul.addr %s532, 8
      %s534 = scalar_lea.vmem %s4, %s533
      // Predicated region
      $region41: #{resnet_block.4} parent=35 // pred_check
        %p535 = pneg %p125
      $region42: #{resnet_block.4} parent=35 // pred_check_branch
        %537 = sbr.rel (%p535) target = $region44
      $region43: #{resnet_block.4} parent=35 // pred_region
        _
      $region44: #{resnet_block.4} parent=35 // pred_fallthru
        _
      // Predicated region
      $region45: #{resnet_block.4} parent=35 // pred_check
        %p538 = pneg %p146
      $region46: #{resnet_block.4} parent=35 // pred_check_branch
        %540 = sbr.rel (%p538) target = $region48
      $region47: #{resnet_block.4} parent=35 // pred_region
        _
      $region48: #{resnet_block.4} parent=35 // pred_fallthru
        _
      // Predicated region
      $region49: #{resnet_block.4} parent=35 // pred_check
        %p541 = pneg %p167
      $region50: #{resnet_block.4} parent=35 // pred_check_branch
        %543 = sbr.rel (%p541) target = $region52
      $region51: #{resnet_block.4} parent=35 // pred_region
        _
      $region52: #{resnet_block.4} parent=35 // pred_fallthru
        _
      // Predicated region
      $region53: #{resnet_block.4} parent=35 // pred_check
        %p544 = pneg %p146
      $region54: #{resnet_block.4} parent=35 // pred_check_branch
        %546 = sbr.rel (%p544) target = $region56
      $region55: #{resnet_block.4} parent=35 // pred_region
        _
      $region56: #{resnet_block.4} parent=35 // pred_fallthru
        _
      // Predicated region
      $region57: #{resnet_block.4} parent=35 // pred_check
        %p547 = pneg %p167
      $region58: #{resnet_block.4} parent=35 // pred_check_branch
        %549 = sbr.rel (%p547) target = $region60
      $region59: #{resnet_block.4} parent=35 // pred_region
        _
      $region60: #{resnet_block.4} parent=35 // pred_fallthru
        _
    $region36: #{resnet_block.4} parent=5 // pred_fallthru
      _
    %p550 = scmp.le.s32.totalorder 2, %s13
    // Predicated region
    $region61: #{resnet_block.4} parent=5 // pred_check
      %p551 = pneg %p550
    $region62: #{resnet_block.4} parent=5 // pred_check_branch
      %553 = sbr.rel (%p551) target = $region64
    $region63: #{resnet_block.4} parent=5 // pred_region
      %s554 = ssub.s32 %s13, 2
      // Predicated region
      $region65: #{resnet_block.4} parent=63 // pred_check
        %p555 = pneg %p131
      $region66: #{resnet_block.4} parent=63 // pred_check_branch
        %557 = sbr.rel (%p555) target = $region68
      $region67: #{resnet_block.4} parent=63 // pred_region
        %p558 = scmp.lt.s32.totalorder %s19, 1
        %s559 = scalar_select %p558, %s19, 1
        %s560 = smul.addr %s559, 8
        %s561 = scalar_lea.vmem %s4, %s560
      $region68: #{resnet_block.4} parent=63 // pred_fallthru
        _
    $region64: #{resnet_block.4} parent=5 // pred_fallthru
      _
  $region6: #{resnet_block.4} parent=0 // loop_footer
    %s17 = sadd.s32 1, %s13
  $region7: #{resnet_block.4} parent=0 // loop_footer_branch
    %12 = sbr.rel target = $region3
  $region8: #{resnet_block.4} parent=0 // loop_exit
    _

// kernel: resnet_block.3
$region0: #{resnet_block.3}
  #allocation0 [shape = 'u32[]', space=smem, size = 0x4, offset = 0x4, fixed_abs, tag = 'smem constant byte address 0x4 - core index']
  #allocation1 [shape = 'u32[144,128]{1,0:T(1,128)}', space=vmem, size = 0x12000, scoped, tag = 'internal scratch']
  %s0 = inlined_call_operand.vmem [shape: f32[2,8,64], index: 0, kind: input, shape index: {}]
  %s1 = inlined_call_operand.hbm [shape: f32[3,8,8], index: 1, kind: input, shape index: {}]
  %s2 = inlined_call_operand.vmem [shape: f32[8,1], index: 2, kind: input, shape index: {}]
  %s3 = inlined_call_operand.vmem [shape: f32[8,1], index: 3, kind: input, shape index: {}]
  %s4 = inlined_call_operand.vmem [shape: f32[2,8,64], index: 4, kind: output, shape index: {0}]
  %s5 = inlined_call_operand.vmem [shape: f32[8,1], index: 5, kind: output, shape index: {1}]
  %s6 = inlined_call_operand.vmem [shape: f32[8,1], index: 6, kind: output, shape index: {2}]
  %7 = xla_tuple %s4, %s5, %s6
  %s8 = sld [smem:[#allocation0]]
  $region73: #{resnet_block.3} parent=0
    _
  %s10 = ssub.s32 1, %s8
  %s11 = scalar_select 0, %s10, %s8
  $region1: #{resnet_block.3} parent=0
    #allocation2 [shape = 'u8[12288]{0}', space=vmem, size = 0x3000, scoped, tag = 'input window, operand 1, single buffered']
    #allocation3 [shape = 's32[2]{0}', space=sflag, size = 0x8, scoped, tag = 'scoped memory for resnet_block.3']
    %12 = vsyncpa [#allocation3], 0
    loop: start=0, step=1, limit=4
    $region2: #{resnet_block.3} parent=1 // loop_pre_header
      _
    $region3: #{resnet_block.3} parent=1 // loop_header
      %s14 = sphi 0, %s18
      %p15 = scmp.ge.s32.totalorder %s14, 4
      %s24 = sphi 0, %s26
      %s27 = sphi 0, %s24
      %s28 = sphi 0, %s27
      %s44 = sphi 0, %s28
      %s48 = sphi 0, %s48
      %s50 = sphi 0, %s48
      %s51 = sphi 0, %s50
      %s65 = sphi 0, %s51
      %s69 = sphi 0, %s69
      %s71 = sphi 0, %s69
      %s72 = sphi 0, %s71
      %s86 = sphi 0, %s72
      %s90 = sphi 0, %s90
      %s92 = sphi 0, %s90
      %s93 = sphi 0, %s92
      %s107 = sphi 0, %s93
      %s113 = sphi 0, %s115
      %s116 = sphi 0, %s113
      %s117 = sphi 0, %s116
      %s133 = sphi 0, %s117
      %s137 = sphi 0, %s137
      %s139 = sphi 0, %s137
      %s140 = sphi 0, %s139
      %s154 = sphi 0, %s140
      %s158 = sphi 0, %s158
      %s160 = sphi 0, %s158
      %s161 = sphi 0, %s160
      %s175 = sphi 0, %s161
    $region4: #{resnet_block.3} parent=1 // loop_header_branch
      %17 = sbr.rel (%p15) target = $region8
    $region5: #{resnet_block.3} parent=1 // loop_body
      %s19 = ssub.s32 %s14, 1
      %s20 = ssub.s32 %s14, 2
      %s21 = sadd.s32 %s14, 1
      %s22 = ssub.s32 %s14, %s21
      %p23 = scmp.eq.s32.totalorder %s22, 0
      %s25 = sadd.s32 %s24, 1
      %s26 = scalar_select %p23, %s24, %s25
      %p29 = pneg %p23
      %p30 = scmp.eq.s32.totalorder %s14, 1
      %p31 = por %p29, %p30
      %p32 = scmp.ne.s32.totalorder %s24, %s27
      %p33 = scmp.eq.s32.totalorder %s14, 0
      %p34 = por %p32, %p33
      %p35 = scmp.ne.s32.totalorder %s24, %s27
      %p36 = scmp.eq.s32.totalorder %s19, 1
      %p37 = por %p35, %p36
      %p38 = scmp.ne.s32.totalorder %s27, %s28
      %p39 = scmp.eq.s32.totalorder %s19, 0
      %p40 = por %p38, %p39
      %p41 = scmp.ne.s32.totalorder %s27, %s28
      %p42 = scmp.eq.s32.totalorder %s20, 1
      %p43 = por %p41, %p42
      %p45 = scmp.ne.s32.totalorder %s28, %s44
      %p46 = scmp.eq.s32.totalorder %s20, 0
      %p47 = por %p45, %p46
      %s49 = sadd.s32 %s48, 1
      %p52 = scmp.eq.s32.totalorder %s14, 1
      %p53 = scmp.ne.s32.totalorder %s48, %s50
      %p54 = scmp.eq.s32.totalorder %s14, 0
      %p55 = por %p53, %p54
      %p56 = scmp.ne.s32.totalorder %s48, %s50
      %p57 = scmp.eq.s32.totalorder %s19, 1
      %p58 = por %p56, %p57
      %p59 = scmp.ne.s32.totalorder %s50, %s51
      %p60 = scmp.eq.s32.totalorder %s19, 0
      %p61 = por %p59, %p60
      %p62 = scmp.ne.s32.totalorder %s50, %s51
      %p63 = scmp.eq.s32.totalorder %s20, 1
      %p64 = por %p62, %p63
      %p66 = scmp.ne.s32.totalorder %s51, %s65
      %p67 = scmp.eq.s32.totalorder %s20, 0
      %p68 = por %p66, %p67
      %s70 = sadd.s32 %s69, 1
      %p73 = scmp.eq.s32.totalorder %s14, 1
      %p74 = scmp.ne.s32.totalorder %s69, %s71
      %p75 = scmp.eq.s32.totalorder %s14, 0
      %p76 = por %p74, %p75
      %p77 = scmp.ne.s32.totalorder %s69, %s71
      %p78 = scmp.eq.s32.totalorder %s19, 1
      %p79 = por %p77, %p78
      %p80 = scmp.ne.s32.totalorder %s71, %s72
      %p81 = scmp.eq.s32.totalorder %s19, 0
      %p82 = por %p80, %p81
      %p83 = scmp.ne.s32.totalorder %s71, %s72
      %p84 = scmp.eq.s32.totalorder %s20, 1
      %p85 = por %p83, %p84
      %p87 = scmp.ne.s32.totalorder %s72, %s86
      %p88 = scmp.eq.s32.totalorder %s20, 0
      %p89 = por %p87, %p88
      %s91 = sadd.s32 %s90, 1
      %p94 = scmp.eq.s32.totalorder %s14, 1
      %p95 = scmp.ne.s32.totalorder %s90, %s92
      %p96 = scmp.eq.s32.totalorder %s14, 0
      %p97 = por %p95, %p96
      %p98 = scmp.ne.s32.totalorder %s90, %s92
      %p99 = scmp.eq.s32.totalorder %s19, 1
      %p100 = por %p98, %p99
      %p101 = scmp.ne.s32.totalorder %s92, %s93
      %p102 = scmp.eq.s32.totalorder %s19, 0
      %p103 = por %p101, %p102
      %p104 = scmp.ne.s32.totalorder %s92, %s93
      %p105 = scmp.eq.s32.totalorder %s20, 1
      %p106 = por %p104, %p105
      %p108 = scmp.ne.s32.totalorder %s93, %s107
      %p109 = scmp.eq.s32.totalorder %s20, 0
      %p110 = por %p108, %p109
      %s111 = ssub.s32 %s14, %s21
      %p112 = scmp.eq.s32.totalorder %s111, 0
      %s114 = sadd.s32 %s113, 1
      %s115 = scalar_select %p112, %s113, %s114
      %p118 = pneg %p112
      %p119 = scmp.eq.s32.totalorder %s14, 1
      %p120 = por %p118, %p119
      %p121 = scmp.ne.s32.totalorder %s113, %s116
      %p122 = scmp.eq.s32.totalorder %s14, 0
      %p123 = por %p121, %p122
      %p124 = scmp.ne.s32.totalorder %s113, %s116
      %p125 = scmp.eq.s32.totalorder %s19, 1
      %p126 = por %p124, %p125
      %p127 = scmp.ne.s32.totalorder %s116, %s117
      %p128 = scmp.eq.s32.totalorder %s19, 0
      %p129 = por %p127, %p128
      %p130 = scmp.ne.s32.totalorder %s116, %s117
      %p131 = scmp.eq.s32.totalorder %s20, 1
      %p132 = por %p130, %p131
      %p134 = scmp.ne.s32.totalorder %s117, %s133
      %p135 = scmp.eq.s32.totalorder %s20, 0
      %p136 = por %p134, %p135
      %s138 = sadd.s32 %s137, 1
      %p141 = scmp.eq.s32.totalorder %s14, 1
      %p142 = scmp.ne.s32.totalorder %s137, %s139
      %p143 = scmp.eq.s32.totalorder %s14, 0
      %p144 = por %p142, %p143
      %p145 = scmp.ne.s32.totalorder %s137, %s139
      %p146 = scmp.eq.s32.totalorder %s19, 1
      %p147 = por %p145, %p146
      %p148 = scmp.ne.s32.totalorder %s139, %s140
      %p149 = scmp.eq.s32.totalorder %s19, 0
      %p150 = por %p148, %p149
      %p151 = scmp.ne.s32.totalorder %s139, %s140
      %p152 = scmp.eq.s32.totalorder %s20, 1
      %p153 = por %p151, %p152
      %p155 = scmp.ne.s32.totalorder %s140, %s154
      %p156 = scmp.eq.s32.totalorder %s20, 0
      %p157 = por %p155, %p156
      %s159 = sadd.s32 %s158, 1
      %p162 = scmp.eq.s32.totalorder %s14, 1
      %p163 = scmp.ne.s32.totalorder %s158, %s160
      %p164 = scmp.eq.s32.totalorder %s14, 0
      %p165 = por %p163, %p164
      %p166 = scmp.ne.s32.totalorder %s158, %s160
      %p167 = scmp.eq.s32.totalorder %s19, 1
      %p168 = por %p166, %p167
      %p169 = scmp.ne.s32.totalorder %s160, %s161
      %p170 = scmp.eq.s32.totalorder %s19, 0
      %p171 = por %p169, %p170
      %p172 = scmp.ne.s32.totalorder %s160, %s161
      %p173 = scmp.eq.s32.totalorder %s20, 1
      %p174 = por %p172, %p173
      %p176 = scmp.ne.s32.totalorder %s161, %s175
      %p177 = scmp.eq.s32.totalorder %s20, 0
      %p178 = por %p176, %p177
      %p179 = scmp.le.s32.totalorder 1, %s14
      %p180 = scmp.lt.s32.totalorder %s14, 3
      %p181 = pnand %p179, %p180
      %p182 = pneg %p181
      // Predicated region
      $region9: #{resnet_block.3} parent=5 // pred_check
        _
      $region10: #{resnet_block.3} parent=5 // pred_check_branch
        %184 = sbr.rel (%p181) target = $region12
      $region11: #{resnet_block.3} parent=5 // pred_region
        %s185 = ssub.s32 %s14, 1
        // Predicated region
        $region13: #{resnet_block.3} parent=11 // pred_check
          %p186 = pneg %p61
        $region14: #{resnet_block.3} parent=11 // pred_check_branch
          %188 = sbr.rel (%p186) target = $region16
        $region15: #{resnet_block.3} parent=11 // pred_region
          %s190 = ssub.s32 384, 384
          %191 = vsyncadd [#allocation3], %s190
          %s192 = sshll.u32 [#allocation2], 4
          %s193 = int_to_ptr.vmem [resolvable:$true] %s192
          %198 = dma.hbm_to_vmem [thread:$0]  %s1, 384, %s193, [#allocation3], 128, 128, 8
        $region16: #{resnet_block.3} parent=11 // pred_fallthru
          _
        // Predicated region
        $region17: #{resnet_block.3} parent=11 // pred_check
          %p199 = pneg %p82
        $region18: #{resnet_block.3} parent=11 // pred_check_branch
          %201 = sbr.rel (%p199) target = $region20
        $region19: #{resnet_block.3} parent=11 // pred_region
          _
        $region20: #{resnet_block.3} parent=11 // pred_fallthru
          _
        // Predicated region
        $region21: #{resnet_block.3} parent=11 // pred_check
          %p202 = pneg %p103
        $region22: #{resnet_block.3} parent=11 // pred_check_branch
          %204 = sbr.rel (%p202) target = $region24
        $region23: #{resnet_block.3} parent=11 // pred_region
          _
        $region24: #{resnet_block.3} parent=11 // pred_fallthru
          _
      $region12: #{resnet_block.3} parent=5 // pred_fallthru
        _
      %p205 = scmp.lt.s32.totalorder %s14, 2
      // Predicated region
      $region25: #{resnet_block.3} parent=5 // pred_check
        %p206 = pneg %p205
      $region26: #{resnet_block.3} parent=5 // pred_check_branch
        %208 = sbr.rel (%p206) target = $region28
      $region27: #{resnet_block.3} parent=5 // pred_region
        // Predicated region
        $region29: #{resnet_block.3} parent=27 // pred_check
          %p209 = pneg %p34
        $region30: #{resnet_block.3} parent=27 // pred_check_branch
          %211 = sbr.rel (%p209) target = $region32
        $region31: #{resnet_block.3} parent=27 // pred_region
          %p212 = scmp.lt.s32.totalorder %s14, 1
          %s213 = scalar_select %p212, %s14, 1
          %s214 = smul.addr %s213, 8
          %s215 = scalar_lea.vmem %s0, %s214
        $region32: #{resnet_block.3} parent=27 // pred_fallthru
          _
      $region28: #{resnet_block.3} parent=5 // pred_fallthru
        _
      %p216 = scmp.le.s32.totalorder 1, %s14
      %p217 = scmp.lt.s32.totalorder %s14, 3
      %p218 = pnand %p216, %p217
      %p219 = pneg %p218
      // Predicated region
      $region33: #{resnet_block.3} parent=5 // pred_check
        _
      $region34: #{resnet_block.3} parent=5 // pred_check_branch
        %221 = sbr.rel (%p218) target = $region36
      $region35: #{resnet_block.3} parent=5 // pred_region
        %s222 = ssub.s32 %s14, 1
        // Predicated region
        $region37: #{resnet_block.3} parent=35 // pred_check
          %p223 = pneg %p61
        $region38: #{resnet_block.3} parent=35 // pred_check_branch
          %225 = sbr.rel (%p223) target = $region40
        $region39: #{resnet_block.3} parent=35 // pred_region
          %226 = dma.done [#allocation3], 384
        $region40: #{resnet_block.3} parent=35 // pred_fallthru
          _
        %p227 = scmp.lt.s32.totalorder %s19, 1
        %s228 = scalar_select %p227, %s19, 1
        %s229 = smul.addr %s228, 8
        %s230 = scalar_lea.vmem %s0, %s229
        %p231 = pneg %p40
        %p232 = pneg %p37
        %p233 = pneg %p61
        %p234 = pneg %p58
        %p235 = pneg %p82
        %p236 = pneg %p79
        %p237 = pneg %p103
        %p238 = pneg %p100
        %p239 = pneg %p129
        %p240 = pneg %p126
        %p241 = scmp.lt.s32.totalorder %s19, 1
        %s242 = scalar_select %p241, %s19, 1
        %s243 = smul.addr %s242, 8
        %s244 = scalar_lea.vmem %s4, %s243
        %p245 = pneg %p150
        %p246 = pneg %p147
        %p247 = pneg %p171
        %p248 = pneg %p168
        %p249 = scmp.lt.s32.totalorder %s19, 1
        %s250 = scalar_select %p249, %s19, 1
        %s251 = smul.addr %s250, 8
        %s252 = scalar_lea.vmem %s0, %s251
        %p253 = scmp.lt.s32.totalorder %s19, 1
        %s254 = scalar_select %p253, %s19, 1
        %s255 = smul.addr %s254, 8
        %s256 = scalar_lea.vmem %s4, %s255
        %v257 = vld [vmem:[%s252] sm:$0xff]
        %v258 = vlaneseq
        %v259 = vand.u32 %v258, 127
        %vm260 = vcmask 1048064
        %261 = vrot.lane.b32.xlu0 %v257, 64
        %v262 = vpop.permute.xlu0 %261
        %v263 = vsel %vm260, %v262, %v257
        %264 = vrot.lane.b32.xlu0 %v263, 64
        %v265 = vpop.permute.xlu0 %264
        %v266 = vsel %vm260, %v265, %v257
        %vm267 = vcmp.eq.s32.totalorder %v259, 0
        %v268 = vsel %vm267, 1, 0
        %vm269 = vcmp.eq.s32.totalorder %v268, 1
        %271 = vrot.lane.b32.xlu0 %v266, 127
        %v272 = vpop.permute.xlu0 %271
        %274 = vrot.lane.b32.xlu0 %v266, 65
        %v275 = vpop.permute.xlu0 %274
        %v277 = vsel %vm269, %v272, %v275
        %vm278 = vcmp.eq.s32.totalorder %v259, 63
        %v279 = vsel %vm278, 1, 0
        %vm280 = vcmp.eq.s32.totalorder %v279, 1
        %v281 = vsel %vm280, %v275, %v272
        %s282 = scalar_lea.vmem [#allocation2], 8
        %v283 = vld [vmem:[%s282] sm:$0xff]
        %v284 = vld [vmem:[#allocation2] sm:$0xff]
        %vm285 = vcmask 64512
        %v287 = vsel %vm285, %v284, 0
        %289 = vmatprep.subr.mxu0 0.0
        %290 = vmatpush1.msra.mxu0 0.0
        %291 = vmatprep.subr.mxu0 0.0
        %292 = vmatpush1.msra.mxu0 0.0
        %293 = vmatprep.subr.mxu0 0.0
        %294 = vmatpush1.msra.mxu0 0.0
        %295 = vmatprep.subr.mxu0 0.0
        %296 = vmatpush1.msra.mxu0 0.0
        %297 = vmatprep.subr.mxu0 0.0
        %298 = vmatpush1.msra.mxu0 0.0
        %299 = vmatprep.subr.mxu0 0.0
        %300 = vmatpush1.msra.mxu0 0.0
        %301 = vmatprep.subr.mxu0 0.0
        %302 = vmatpush1.msra.mxu0 0.0
        %303 = vmatprep.subr.mxu0 0.0
        %304 = vmatpush1.msra.mxu0 0.0
        %305 = vmatprep.subr.mxu0 0.0
        %306 = vmatpush1.msra.mxu0 0.0
        %307 = vmatprep.subr.mxu0 0.0
        %308 = vmatpush1.msra.mxu0 0.0
        %309 = vmatprep.subr.mxu0 0.0
        %310 = vmatpush1.msra.mxu0 0.0
        %311 = vmatprep.subr.mxu0 0.0
        %312 = vmatpush1.msra.mxu0 0.0
        %313 = vmatprep.subr.mxu0 0.0
        %314 = vmatpush1.msra.mxu0 0.0
        %315 = vmatprep.subr.mxu0 0.0
        %316 = vmatpush1.msra.mxu0 0.0
        %317 = vmatprep.subr.mxu0 0.0
        %318 = vmatpush1.msra.mxu0 0.0
        %319 = vmatprep.subr.mxu0 0.0
        %320 = vmatpush1.msra.mxu0 %v277
        %321 = vmatprep.subr.mxu0 0.0
        %322 = vmatpush2.msra.mxu0 0.0
        %323 = vmatprep.subr.mxu0 0.0
        %324 = vmatpush2.msra.mxu0 0.0
        %325 = vmatprep.subr.mxu0 0.0
        %326 = vmatpush2.msra.mxu0 0.0
        %327 = vmatprep.subr.mxu0 0.0
        %328 = vmatpush2.msra.mxu0 0.0
        %329 = vmatprep.subr.mxu0 0.0
        %330 = vmatpush2.msra.mxu0 0.0
        %331 = vmatprep.subr.mxu0 0.0
        %332 = vmatpush2.msra.mxu0 0.0
        %333 = vmatprep.subr.mxu0 0.0
        %334 = vmatpush2.msra.mxu0 0.0
        %335 = vmatprep.subr.mxu0 0.0
        %336 = vmatpush2.msra.mxu0 0.0
        %337 = vmatprep.subr.mxu0 0.0
        %338 = vmatpush2.msra.mxu0 0.0
        %339 = vmatprep.subr.mxu0 0.0
        %340 = vmatpush2.msra.mxu0 0.0
        %341 = vmatprep.subr.mxu0 0.0
        %342 = vmatpush2.msra.mxu0 0.0
        %343 = vmatprep.subr.mxu0 0.0
        %344 = vmatpush2.msra.mxu0 0.0
        %345 = vmatprep.subr.mxu0 0.0
        %346 = vmatpush2.msra.mxu0 0.0
        %347 = vmatprep.subr.mxu0 0.0
        %348 = vmatpush2.msra.mxu0 0.0
        %349 = vmatprep.subr.mxu0 0.0
        %350 = vmatpush2.msra.mxu0 0.0
        %351 = vmatprep.subr.mxu0 0.0
        %352 = vmatpush2.msra.mxu0 0.0
        %353 = vmatprep.mubr.f32.mxu0 0.0
        %354 = vmatmul.mubr.f32.gmra.mxu0 %v287
        %v355 = vpop.f32.mrf.mxu0
        %v356 = vadd.f32 0.0, %v355
        %v357 = vpop.f32.mrf.mxu0
        %358 = vdwg.mxu0
        %v360 = vsel %vm285, %v283, 0
        %362 = vmatprep.subr.mxu0 0.0
        %363 = vmatpush1.msra.mxu0 0.0
        %364 = vmatprep.subr.mxu0 0.0
        %365 = vmatpush1.msra.mxu0 0.0
        %366 = vmatprep.subr.mxu0 0.0
        %367 = vmatpush1.msra.mxu0 0.0
        %368 = vmatprep.subr.mxu0 0.0
        %369 = vmatpush1.msra.mxu0 0.0
        %370 = vmatprep.subr.mxu0 0.0
        %371 = vmatpush1.msra.mxu0 0.0
        %372 = vmatprep.subr.mxu0 0.0
        %373 = vmatpush1.msra.mxu0 0.0
        %374 = vmatprep.subr.mxu0 0.0
        %375 = vmatpush1.msra.mxu0 0.0
        %376 = vmatprep.subr.mxu0 0.0
        %377 = vmatpush1.msra.mxu0 0.0
        %378 = vmatprep.subr.mxu0 0.0
        %379 = vmatpush1.msra.mxu0 0.0
        %380 = vmatprep.subr.mxu0 0.0
        %381 = vmatpush1.msra.mxu0 0.0
        %382 = vmatprep.subr.mxu0 0.0
        %383 = vmatpush1.msra.mxu0 0.0
        %384 = vmatprep.subr.mxu0 0.0
        %385 = vmatpush1.msra.mxu0 0.0
        %386 = vmatprep.subr.mxu0 0.0
        %387 = vmatpush1.msra.mxu0 0.0
        %388 = vmatprep.subr.mxu0 0.0
        %389 = vmatpush1.msra.mxu0 0.0
        %390 = vmatprep.subr.mxu0 0.0
        %391 = vmatpush1.msra.mxu0 0.0
        %392 = vmatprep.subr.mxu0 0.0
        %393 = vmatpush1.msra.mxu0 %v257
        %394 = vmatprep.subr.mxu0 0.0
        %395 = vmatpush2.msra.mxu0 0.0
        %396 = vmatprep.subr.mxu0 0.0
        %397 = vmatpush2.msra.mxu0 0.0
        %398 = vmatprep.subr.mxu0 0.0
        %399 = vmatpush2.msra.mxu0 0.0
        %400 = vmatprep.subr.mxu0 0.0
        %401 = vmatpush2.msra.mxu0 0.0
        %402 = vmatprep.subr.mxu0 0.0
        %403 = vmatpush2.msra.mxu0 0.0
        %404 = vmatprep.subr.mxu0 0.0
        %405 = vmatpush2.msra.mxu0 0.0
        %406 = vmatprep.subr.mxu0 0.0
        %407 = vmatpush2.msra.mxu0 0.0
        %408 = vmatprep.subr.mxu0 0.0
        %409 = vmatpush2.msra.mxu0 0.0
        %410 = vmatprep.subr.mxu0 0.0
        %411 = vmatpush2.msra.mxu0 0.0
        %412 = vmatprep.subr.mxu0 0.0
        %413 = vmatpush2.msra.mxu0 0.0
        %414 = vmatprep.subr.mxu0 0.0
        %415 = vmatpush2.msra.mxu0 0.0
        %416 = vmatprep.subr.mxu0 0.0
        %417 = vmatpush2.msra.mxu0 0.0
        %418 = vmatprep.subr.mxu0 0.0
        %419 = vmatpush2.msra.mxu0 0.0
        %420 = vmatprep.subr.mxu0 0.0
        %421 = vmatpush2.msra.mxu0 0.0
        %422 = vmatprep.subr.mxu0 0.0
        %423 = vmatpush2.msra.mxu0 0.0
        %424 = vmatprep.subr.mxu0 0.0
        %425 = vmatpush2.msra.mxu0 0.0
        %426 = vmatprep.mubr.f32.mxu0 0.0
        %427 = vmatmul.mubr.f32.gmra.mxu0 %v360
        %v428 = vpop.f32.mrf.mxu0
        %v429 = vadd.f32 %v356, %v428
        %v430 = vpop.f32.mrf.mxu0
        %431 = vdwg.mxu0
        %s432 = scalar_lea.vmem [#allocation2], 16
        %v433 = vld [vmem:[%s432] sm:$0xff]
        %v435 = vsel %vm285, %v433, 0
        %437 = vmatprep.subr.mxu0 0.0
        %438 = vmatpush1.msra.mxu0 0.0
        %439 = vmatprep.subr.mxu0 0.0
        %440 = vmatpush1.msra.mxu0 0.0
        %441 = vmatprep.subr.mxu0 0.0
        %442 = vmatpush1.msra.mxu0 0.0
        %443 = vmatprep.subr.mxu0 0.0
        %444 = vmatpush1.msra.mxu0 0.0
        %445 = vmatprep.subr.mxu0 0.0
        %446 = vmatpush1.msra.mxu0 0.0
        %447 = vmatprep.subr.mxu0 0.0
        %448 = vmatpush1.msra.mxu0 0.0
        %449 = vmatprep.subr.mxu0 0.0
        %450 = vmatpush1.msra.mxu0 0.0
        %451 = vmatprep.subr.mxu0 0.0
        %452 = vmatpush1.msra.mxu0 0.0
        %453 = vmatprep.subr.mxu0 0.0
        %454 = vmatpush1.msra.mxu0 0.0
        %455 = vmatprep.subr.mxu0 0.0
        %456 = vmatpush1.msra.mxu0 0.0
        %457 = vmatprep.subr.mxu0 0.0
        %458 = vmatpush1.msra.mxu0 0.0
        %459 = vmatprep.subr.mxu0 0.0
        %460 = vmatpush1.msra.mxu0 0.0
        %461 = vmatprep.subr.mxu0 0.0
        %462 = vmatpush1.msra.mxu0 0.0
        %463 = vmatprep.subr.mxu0 0.0
        %464 = vmatpush1.msra.mxu0 0.0
        %465 = vmatprep.subr.mxu0 0.0
        %466 = vmatpush1.msra.mxu0 0.0
        %467 = vmatprep.subr.mxu0 0.0
        %468 = vmatpush1.msra.mxu0 %v281
        %469 = vmatprep.subr.mxu0 0.0
        %470 = vmatpush2.msra.mxu0 0.0
        %471 = vmatprep.subr.mxu0 0.0
        %472 = vmatpush2.msra.mxu0 0.0
        %473 = vmatprep.subr.mxu0 0.0
        %474 = vmatpush2.msra.mxu0 0.0
        %475 = vmatprep.subr.mxu0 0.0
        %476 = vmatpush2.msra.mxu0 0.0
        %477 = vmatprep.subr.mxu0 0.0
        %478 = vmatpush2.msra.mxu0 0.0
        %479 = vmatprep.subr.mxu0 0.0
        %480 = vmatpush2.msra.mxu0 0.0
        %481 = vmatprep.subr.mxu0 0.0
        %482 = vmatpush2.msra.mxu0 0.0
        %483 = vmatprep.subr.mxu0 0.0
        %484 = vmatpush2.msra.mxu0 0.0
        %485 = vmatprep.subr.mxu0 0.0
        %486 = vmatpush2.msra.mxu0 0.0
        %487 = vmatprep.subr.mxu0 0.0
        %488 = vmatpush2.msra.mxu0 0.0
        %489 = vmatprep.subr.mxu0 0.0
        %490 = vmatpush2.msra.mxu0 0.0
        %491 = vmatprep.subr.mxu0 0.0
        %492 = vmatpush2.msra.mxu0 0.0
        %493 = vmatprep.subr.mxu0 0.0
        %494 = vmatpush2.msra.mxu0 0.0
        %495 = vmatprep.subr.mxu0 0.0
        %496 = vmatpush2.msra.mxu0 0.0
        %497 = vmatprep.subr.mxu0 0.0
        %498 = vmatpush2.msra.mxu0 0.0
        %499 = vmatprep.subr.mxu0 0.0
        %500 = vmatpush2.msra.mxu0 0.0
        %501 = vmatprep.mubr.f32.mxu0 0.0
        %502 = vmatmul.mubr.f32.gmra.mxu0 %v435
        %v503 = vpop.f32.mrf.mxu0
        %v504 = vadd.f32 0.0, %v503
        %v505 = vpop.f32.mrf.mxu0
        %506 = vdwg.mxu0
        %v507 = vadd.f32 %v429, %v504
        %vm508 = vcmask 523264
        %509 = vst.msk [vmem:[%s256] sm:$0xff] %vm508, %v507
        %p510 = scmp.eq.s32.totalorder %s19, 0
        // Predicated region
        $region41: #{resnet_block.3} parent=35 // pred_check
          %p511 = pneg %p510
        $region42: #{resnet_block.3} parent=35 // pred_check_branch
          %513 = sbr.rel (%p511) target = $region44
        $region43: #{resnet_block.3} parent=35 // pred_region
          %vm514 = vcmask 7168
          %515 = vst.msk [vmem:[%s5] sm:$0xff] %vm514, 0.0
          %516 = vst.msk [vmem:[%s6] sm:$0xff] %vm514, 0.0
        $region44: #{resnet_block.3} parent=35 // pred_fallthru
          _
        %v517 = vld [vmem:[%s5] sm:$0xff]
        %v518 = vsel %vm508, %v507, 0.0
        %519 = vadd.xlane.f32.xlu0 %v518
        %v520 = vpop.xlane.xlu0 %519
        %v521 = vadd.f32 %v517, %v520
        %vm522 = vcmask 7168
        %523 = vst.msk [vmem:[%s5] sm:$0xff] %vm522, %v521
        %v524 = vld [vmem:[%s6] sm:$0xff]
        %v525 = vmul.f32 %v507, %v507
        %v526 = vsel %vm508, %v525, 0.0
        %527 = vadd.xlane.f32.xlu0 %v526
        %v528 = vpop.xlane.xlu0 %527
        %v529 = vadd.f32 %v524, %v528
        %530 = vst.msk [vmem:[%s6] sm:$0xff] %vm522, %v529
        %p531 = scmp.lt.s32.totalorder %s19, 1
        %s532 = scalar_select %p531, %s19, 1
        %s533 = smul.addr %s532, 8
        %s534 = scalar_lea.vmem %s4, %s533
        // Predicated region
        $region45: #{resnet_block.3} parent=35 // pred_check
          %p535 = pneg %p126
        $region46: #{resnet_block.3} parent=35 // pred_check_branch
          %537 = sbr.rel (%p535) target = $region48
        $region47: #{resnet_block.3} parent=35 // pred_region
          _
        $region48: #{resnet_block.3} parent=35 // pred_fallthru
          _
        // Predicated region
        $region49: #{resnet_block.3} parent=35 // pred_check
          %p538 = pneg %p147
        $region50: #{resnet_block.3} parent=35 // pred_check_branch
          %540 = sbr.rel (%p538) target = $region52
        $region51: #{resnet_block.3} parent=35 // pred_region
          _
        $region52: #{resnet_block.3} parent=35 // pred_fallthru
          _
        // Predicated region
        $region53: #{resnet_block.3} parent=35 // pred_check
          %p541 = pneg %p168
        $region54: #{resnet_block.3} parent=35 // pred_check_branch
          %543 = sbr.rel (%p541) target = $region56
        $region55: #{resnet_block.3} parent=35 // pred_region
          _
        $region56: #{resnet_block.3} parent=35 // pred_fallthru
          _
        // Predicated region
        $region57: #{resnet_block.3} parent=35 // pred_check
          %p544 = pneg %p147
        $region58: #{resnet_block.3} parent=35 // pred_check_branch
          %546 = sbr.rel (%p544) target = $region60
        $region59: #{resnet_block.3} parent=35 // pred_region
          _
        $region60: #{resnet_block.3} parent=35 // pred_fallthru
          _
        // Predicated region
        $region61: #{resnet_block.3} parent=35 // pred_check
          %p547 = pneg %p168
        $region62: #{resnet_block.3} parent=35 // pred_check_branch
          %549 = sbr.rel (%p547) target = $region64
        $region63: #{resnet_block.3} parent=35 // pred_region
          _
        $region64: #{resnet_block.3} parent=35 // pred_fallthru
          _
      $region36: #{resnet_block.3} parent=5 // pred_fallthru
        _
      %p550 = scmp.le.s32.totalorder 2, %s14
      // Predicated region
      $region65: #{resnet_block.3} parent=5 // pred_check
        %p551 = pneg %p550
      $region66: #{resnet_block.3} parent=5 // pred_check_branch
        %553 = sbr.rel (%p551) target = $region68
      $region67: #{resnet_block.3} parent=5 // pred_region
        %s554 = ssub.s32 %s14, 2
        // Predicated region
        $region69: #{resnet_block.3} parent=67 // pred_check
          %p555 = pneg %p132
        $region70: #{resnet_block.3} parent=67 // pred_check_branch
          %557 = sbr.rel (%p555) target = $region72
        $region71: #{resnet_block.3} parent=67 // pred_region
          %p558 = scmp.lt.s32.totalorder %s20, 1
          %s559 = scalar_select %p558, %s20, 1
          %s560 = smul.addr %s559, 8
          %s561 = scalar_lea.vmem %s4, %s560
        $region72: #{resnet_block.3} parent=67 // pred_fallthru
          _
      $region68: #{resnet_block.3} parent=5 // pred_fallthru
        _
    $region6: #{resnet_block.3} parent=1 // loop_footer
      %s18 = sadd.s32 1, %s14
    $region7: #{resnet_block.3} parent=1 // loop_footer_branch
      %13 = sbr.rel target = $region3
    $region8: #{resnet_block.3} parent=1 // loop_exit
      _
    %562 = vsyncpa [#allocation3], 1
    %s563 = scalar_lea.sflag [#allocation3], 1
    %564 = vsyncpa %s563, 1

</llo_original>
